<compile_context>
chip_gen: v6e
topology: v6e:2x2x1
jax: 0.10.0
libtpu: 0.0.40
codegen_flags: <defaults>
</compile_context>

<pallas_src>
import functools

import jax
import jax.numpy as jnp
from jax.experimental import pallas as pl
from jax.experimental.pallas import tpu as pltpu


def _tpu_generation():
    """Best-effort TPU generation (5 -> v5e, 6 -> v6e, 7 -> v7x...)."""
    try:
        kind = jax.devices()[0].device_kind.lower()
    except Exception:
        return 6
    for g in (7, 6, 5, 4, 3, 2):
        if str(g) in kind:
            return g
    return 6


def _gcn_kernel(x_ref, a_ref, wm_ref, bm_ref, wg_ref, bg_ref, out_ref, *,
                n_real, n_pad, mxu_dtype, out_lanes):
    """One grid step == TB batch samples, fused into a (TB*N, P) row slab.

    x_ref : (M, P)        padded node-feature slab, M = TB*N_pad
    a_ref : (M, M)        block-diagonal adjacency (cross-sample blocks == 0)
    wm_ref: (7, P, P)     conv0..2, readout, pred0, pred1, pred weights
    bm_ref: (7, 1, P)     matching biases (f32)
    wg_ref: (3, 2P, 2P)   per-layer block-diag(gate1, gate2) weights
    bg_ref: (3, 1, 2P)    concat(gate1 bias, gate2 bias) (f32)
    out_ref: (1, TB, out_lanes)  lane-dense prediction slab (lane 0 is valid)
    """
    M, P = x_ref.shape
    TB = M // n_pad

    A = a_ref[...]                      # (M, M) block-diagonal, mxu dtype
    X = x_ref[...]                      # (M, P) fused batch*node slab

    def lin(h, W, b):
        return jnp.dot(h.astype(mxu_dtype), W.astype(mxu_dtype),
                       preferred_element_type=jnp.float32) + b

    # --- 3 graph-conv layers with gated skip connections -------------------
    for layer in range(3):
        X = lin(X, wm_ref[layer], bm_ref[layer])            # conv linear (f32)
        # Aggregation: one K=M matmul instead of TB tiny K=N matmuls.
        Xn = jnp.dot(A, X.astype(mxu_dtype),
                     preferred_element_type=jnp.float32)    # (M, P)
        # Fused gates: [g1 | g2] in a single K=2P matmul.
        G = lin(jnp.concatenate([X, Xn], axis=-1),
                wg_ref[layer], bg_ref[layer])                # (M, 2P)
        g1 = G[:, :P]                                        # gate1(conv_out)
        g2 = G[:, P:]                                        # gate2(aggregated)
        coeff = jax.nn.sigmoid(g1 + g2)
        X = jnp.maximum(coeff * g2 + (1.0 - coeff) * g1, 0.0)   # gated skip+relu

    # --- readout, per-sample node sum, prediction head ---------------------
    R = lin(X, wm_ref[3], bm_ref[3]).reshape(TB, n_pad, P)
    if n_real != n_pad:                 # mask padded nodes out of the node-sum
        node_id = jax.lax.broadcasted_iota(jnp.int32, (TB, n_pad, P), 1)
        R = jnp.where(node_id < n_real, R, 0.0)
    s = jax.nn.sigmoid(jnp.sum(R, axis=1))                   # (TB, P)
    s = jnp.maximum(lin(s, wm_ref[4], bm_ref[4]), 0.0)       # pred layer 0 + relu
    s = jnp.tanh(lin(s, wm_ref[5], bm_ref[5]))               # pred layer 1 + tanh
    pred = lin(s, wm_ref[6], bm_ref[6])                      # (TB, P), col 0 valid

    # Lane-dense, unmasked writeback.
    out_ref[0] = jnp.pad(pred, ((0, 0), (0, out_lanes - P)))


def init_params(key, input_dim, hidden_dim, hidden_dim2):
    """Deterministic PyTorch-style uniform(-1/sqrt(fan_in)) init.
    Flat list [W0, b0, ...] in order: (conv, gate2i, gate2i+1) x 3, readout,
    pred0, pred1, pred."""
    params = []

    def linear(key, fan_in, fan_out):
        kw, kb = jax.random.split(key)
        bound = 1.0 / jnp.sqrt(fan_in)
        W = jax.random.uniform(kw, (fan_in, fan_out), jnp.float32, -bound, bound)
        b = jax.random.uniform(kb, (1, fan_out), jnp.float32, -bound, bound)
        return W, b

    keys = iter(jax.random.split(key, 16))
    conv_dims = [(input_dim, hidden_dim),
                 (hidden_dim, hidden_dim),
                 (hidden_dim, hidden_dim)]
    for i in range(3):
        cw, cb = linear(next(keys), *conv_dims[i])
        g1w, g1b = linear(next(keys), hidden_dim, hidden_dim)
        g2w, g2b = linear(next(keys), hidden_dim, hidden_dim)
        params += [cw, cb, g1w, g1b, g2w, g2b]

    ro_w, ro_b = linear(next(keys), hidden_dim, hidden_dim2)
    p0w, p0b = linear(next(keys), hidden_dim2, hidden_dim2)
    p1w, p1b = linear(next(keys), hidden_dim2, hidden_dim2)
    pw, pb = linear(next(keys), hidden_dim2, 1)
    params += [ro_w, ro_b, p0w, p0b, p1w, p1b, pw, pb]
    return params


def pack_params(params):
    """Pack into four zero-padded stacks:
       W_main (7,P,P)/B_main (7,1,P):  conv0..2, readout, pred0, pred1, pred
       W_gate (3,2P,2P)/B_gate (3,1,2P): per-layer block-diag(gate1, gate2)."""
    ws = params[0::2]
    P = max(max(w.shape) for w in ws)
    W_main = jnp.zeros((7, P, P), jnp.float32)
    B_main = jnp.zeros((7, 1, P), jnp.float32)
    W_gate = jnp.zeros((3, 2 * P, 2 * P), jnp.float32)
    B_gate = jnp.zeros((3, 1, 2 * P), jnp.float32)

    def put_main(Wm, Bm, k, w, b):
        fi, fo = w.shape
        return Wm.at[k, :fi, :fo].set(w), Bm.at[k, 0, :fo].set(b[0])

    for i in range(3):
        cw, cb = params[6 * i], params[6 * i + 1]
        W_main, B_main = put_main(W_main, B_main, i, cw, cb)
        g1w, g1b = params[6 * i + 2], params[6 * i + 3]
        g2w, g2b = params[6 * i + 4], params[6 * i + 5]
        fi, fo = g1w.shape
        W_gate = W_gate.at[i, :fi, :fo].set(g1w)
        B_gate = B_gate.at[i, 0, :fo].set(g1b[0])
        fi2, fo2 = g2w.shape
        W_gate = W_gate.at[i, P:P + fi2, P:P + fo2].set(g2w)
        B_gate = B_gate.at[i, 0, P:P + fo2].set(g2b[0])

    tail = params[18:]
    for k in range(4):
        W_main, B_main = put_main(W_main, B_main, 3 + k,
                                  tail[2 * k], tail[2 * k + 1])
    return W_main, B_main, W_gate, B_gate


@functools.partial(jax.jit, static_argnames=("block_b", "mxu_dtype"))
def gcn_forward(x, a, w_main, b_main, w_gate, b_gate, *,
                block_b=None, mxu_dtype=jnp.bfloat16):
    B, N, Din = x.shape
    P = w_main.shape[1]

    gen = _tpu_generation()
    target_rows = 128 if gen <= 5 else 256          # MXU fill sweet spot
    vmem_cap = (48 << 20) if gen >= 7 else (100 << 20)

    # Node padding -> multiple of 8 so (TB*N, P) <-> (TB, N, P) reshapes are
    # sublane-exact (no hidden VMEM copies).
    N8 = -(-N // 8) * 8

    if block_b is None:
        block_b = max(1, min(B, max(1, target_rows // N8)))
        # v7x has 2 TensorCores sharing the "parallel" batch axis: keep >= 2
        # grid blocks so neither core idles.  (Even num_blocks balances best.)
        if gen >= 7 and B >= 2 and -(-B // block_b) < 2:
            block_b = -(-B // 2)
    num_blocks = -(-B // block_b)
    B_pad = num_blocks * block_b
    M = block_b * N8
    out_lanes = max(128, -(-P // 128) * 128)        # lane-dense output slab

    # ---- inputs: pad, fuse to slab form, cast MXU operands in the wrapper --
    x_p = jnp.pad(x, ((0, B_pad - B), (0, N8 - N), (0, P - Din)))
    x_slab = x_p.reshape(B_pad * N8, P).astype(mxu_dtype)

    a_p = jnp.pad(a, ((0, B_pad - B), (0, N8 - N), (0, N8 - N)))
    a_r = a_p.reshape(num_blocks, block_b, N8, N8)
    eye = jnp.eye(block_b, dtype=a_p.dtype)
    # Block-diagonal adjacency with EXPLICIT zeros in cross-sample blocks.
    a_bd = a_r[:, :, :, None, :] * eye[None, :, None, :, None]
    a_bd = a_bd.reshape(num_blocks * M, M).astype(mxu_dtype)

    wm = w_main.astype(mxu_dtype)
    wg = w_gate.astype(mxu_dtype)                    # biases stay f32

    kernel = functools.partial(_gcn_kernel, n_real=N, n_pad=N8,
                               mxu_dtype=mxu_dtype, out_lanes=out_lanes)

    # ---- per-generation VMEM budget ----------------------------------------
    isz = jnp.dtype(mxu_dtype).itemsize
    est = (2 * (M * P + M * M) * isz                 # double-buffered X / A tiles
           + 2 * block_b * out_lanes * 4             # double-buffered out tile
           + wm.size * isz + b_main.size * 4         # single-copy weights
           + wg.size * isz + b_gate.size * 4
           + 12 * M * 2 * P * 4)                     # f32 in-kernel temporaries
    vmem_limit = int(min(max(4 * est, 32 << 20), vmem_cap))

    out = pl.pallas_call(
        kernel,
        out_shape=jax.ShapeDtypeStruct((num_blocks, block_b, out_lanes),
                                       jnp.float32),
        grid_spec=pltpu.PrefetchScalarGridSpec(
            num_scalar_prefetch=0,
            grid=(num_blocks,),
            in_specs=[
                pl.BlockSpec((M, P), lambda b: (b, 0)),      # X slab tile
                pl.BlockSpec((M, M), lambda b: (b, 0)),      # block-diag A tile
                # Whole-array VMEM residents: one copy, no double-buffering.
                pl.BlockSpec(memory_space=pltpu.MemorySpace.VMEM),  # W_main
                pl.BlockSpec(memory_space=pltpu.MemorySpace.VMEM),  # B_main
                pl.BlockSpec(memory_space=pltpu.MemorySpace.VMEM),  # W_gate
                pl.BlockSpec(memory_space=pltpu.MemorySpace.VMEM),  # B_gate
            ],
            out_specs=pl.BlockSpec((1, block_b, out_lanes),
                                   lambda b: (b, 0, 0)),
        ),
        compiler_params=pltpu.CompilerParams(
            dimension_semantics=("parallel",),
            vmem_limit_bytes=vmem_limit,
        ),
    )(x_slab, a_bd, wm, b_main, wg, b_gate)

    # Lane 0 of the lane-dense slab holds the prediction.
    return out.reshape(B_pad, out_lanes)[:B, 0:1]     # torch shape [B, 1]


def gcn_reference(x, a, params):
    """Pure-JAX reference (unpacked params) for correctness checking."""
    def lin(h, W, b):
        return h @ W + b

    X, A = x, a
    idx = 0
    for _ in range(3):
        cw, cb, g1w, g1b, g2w, g2b = params[idx:idx + 6]
        idx += 6
        X = lin(X, cw, cb)
        Xn = jnp.einsum('bij,bjd->bid', A, X)
        g1 = lin(X, g1w, g1b)
        g2 = lin(Xn, g2w, g2b)
        coeff = jax.nn.sigmoid(g1 + g2)
        X = coeff * g2 + (1.0 - coeff) * g1
        X = jnp.maximum(X, 0.0)
    ro_w, ro_b, p0w, p0b, p1w, p1b, pw, pb = params[idx:idx + 8]
    R = lin(X, ro_w, ro_b)
    s = jax.nn.sigmoid(jnp.sum(R, axis=1))
    s = jnp.maximum(lin(s, p0w, p0b), 0.0)
    s = jnp.tanh(lin(s, p1w, p1b))
    return lin(s, pw, pb)


if __name__ == "__main__":
    B, N = 2, 8
    INPUT_DIM, HIDDEN_DIM, HIDDEN_DIM2 = 16, 32, 32

    key = jax.random.PRNGKey(0)
    kx, ka, kp = jax.random.split(key, 3)

    x = jax.random.normal(kx, (B, N, INPUT_DIM), jnp.float32)
    a = jax.random.uniform(ka, (B, N, N), jnp.float32)

    params = init_params(kp, INPUT_DIM, HIDDEN_DIM, HIDDEN_DIM2)
    packed = pack_params(params)
    ref = gcn_reference(x, a, params)

    # Exact-parity f32 MXU path (1e-4 tolerance).
    out_f32 = jax.block_until_ready(
        gcn_forward(x, a, *packed, mxu_dtype=jnp.float32))
    assert out_f32.shape == (B, 1), out_f32.shape
    assert jnp.allclose(out_f32, ref, atol=1e-4, rtol=1e-4), (out_f32, ref)

    # Default path: bf16 MXU operands, f32 accumulation (looser tolerance).
    out_bf16 = jax.block_until_ready(gcn_forward(x, a, *packed))
    assert out_bf16.shape == (B, 1), out_bf16.shape
    assert jnp.allclose(out_bf16, ref, atol=5e-2, rtol=5e-2), (out_bf16, ref)

    print("KERNEL_OK")
</pallas_src>

<mosaic_0001>
module attributes {stable_mosaic.version = 11 : i64} {
  func.func @_gcn_kernel(%arg0: i32, %arg1: memref<16x32xf32, #tpu.memory_space<vmem>>, %arg2: memref<16x16xf32, #tpu.memory_space<vmem>>, %arg3: memref<7x32x32xf32, #tpu.memory_space<vmem>>, %arg4: memref<7x1x32xf32, #tpu.memory_space<vmem>>, %arg5: memref<3x64x64xf32, #tpu.memory_space<vmem>>, %arg6: memref<3x1x64xf32, #tpu.memory_space<vmem>>, %arg7: memref<1x2x128xf32, #tpu.memory_space<vmem>>) attributes {dimension_semantics = [#tpu.dimension_semantics<parallel>], iteration_bounds = array<i64: 1>, scalar_prefetch = 0 : i64, scratch_operands = 0 : i64, tpu.core_type = #tpu.core_type<tc>, window_params = [{transform_indices = @transform_0, window_bounds = array<i64: 16, 32>}, {transform_indices = @transform_1, window_bounds = array<i64: 16, 16>}, {pipeline_mode = #tpu.pipeline_mode<synchronous>, transform_indices = @transform_2, window_bounds = array<i64: 7, 32, 32>}, {pipeline_mode = #tpu.pipeline_mode<synchronous>, transform_indices = @transform_3, window_bounds = array<i64: 7, 1, 32>}, {pipeline_mode = #tpu.pipeline_mode<synchronous>, transform_indices = @transform_4, window_bounds = array<i64: 3, 64, 64>}, {pipeline_mode = #tpu.pipeline_mode<synchronous>, transform_indices = @transform_5, window_bounds = array<i64: 3, 1, 64>}, {transform_indices = @transform_6, window_bounds = array<i64: 1, 2, 128>}]} {
    %c0 = arith.constant 0 : index
    %c0_0 = arith.constant 0 : index
    %0 = vector.load %arg2[%c0, %c0_0] : memref<16x16xf32, #tpu.memory_space<vmem>>, vector<16x16xf32>
    %c0_1 = arith.constant 0 : index
    %c0_2 = arith.constant 0 : index
    %1 = vector.load %arg1[%c0_1, %c0_2] : memref<16x32xf32, #tpu.memory_space<vmem>>, vector<16x32xf32>
    %c0_3 = arith.constant 0 : index
    %c0_4 = arith.constant 0 : index
    %c0_5 = arith.constant 0 : index
    %2 = vector.load %arg3[%c0_3, %c0_4, %c0_5] : memref<7x32x32xf32, #tpu.memory_space<vmem>>, vector<1x32x32xf32>
    %3 = vector.shape_cast %2 : vector<1x32x32xf32> to vector<32x32xf32>
    %c0_6 = arith.constant 0 : index
    %c0_7 = arith.constant 0 : index
    %c0_8 = arith.constant 0 : index
    %4 = vector.load %arg4[%c0_6, %c0_7, %c0_8] : memref<7x1x32xf32, #tpu.memory_space<vmem>>, vector<1x1x32xf32>
    %5 = vector.shape_cast %4 : vector<1x1x32xf32> to vector<1x32xf32>
    %cst = arith.constant dense<0.000000e+00> : vector<16x32xf32>
    %6 = tpu.matmul %1, %3, %cst {dimension_numbers = #tpu.dot_dimension_numbers<[1], [0], [0], [1], [0, 0, 1, 1], [], []>} : vector<16x32xf32>, vector<32x32xf32>, vector<16x32xf32> -> vector<16x32xf32>
    %7 = vector.broadcast %5 : vector<1x32xf32> to vector<16x32xf32>
    %8 = arith.addf %6, %7 : vector<16x32xf32>
    %cst_9 = arith.constant dense<0.000000e+00> : vector<16x32xf32>
    %9 = tpu.matmul %0, %8, %cst_9 {dimension_numbers = #tpu.dot_dimension_numbers<[1], [0], [0], [1], [0, 0, 1, 1], [], []>} : vector<16x16xf32>, vector<16x32xf32>, vector<16x32xf32> -> vector<16x32xf32>
    %10 = tpu.concatenate %8, %9 in 1 : vector<16x32xf32>, vector<16x32xf32> -> vector<16x64xf32>
    %c0_10 = arith.constant 0 : index
    %c0_11 = arith.constant 0 : index
    %c0_12 = arith.constant 0 : index
    %11 = vector.load %arg5[%c0_10, %c0_11, %c0_12] : memref<3x64x64xf32, #tpu.memory_space<vmem>>, vector<1x64x64xf32>
    %12 = vector.shape_cast %11 : vector<1x64x64xf32> to vector<64x64xf32>
    %c0_13 = arith.constant 0 : index
    %c0_14 = arith.constant 0 : index
    %c0_15 = arith.constant 0 : index
    %13 = vector.load %arg6[%c0_13, %c0_14, %c0_15] : memref<3x1x64xf32, #tpu.memory_space<vmem>>, vector<1x1x64xf32>
    %14 = vector.shape_cast %13 : vector<1x1x64xf32> to vector<1x64xf32>
    %cst_16 = arith.constant dense<0.000000e+00> : vector<16x64xf32>
    %15 = tpu.matmul %10, %12, %cst_16 {dimension_numbers = #tpu.dot_dimension_numbers<[1], [0], [0], [1], [0, 0, 1, 1], [], []>} : vector<16x64xf32>, vector<64x64xf32>, vector<16x64xf32> -> vector<16x64xf32>
    %16 = vector.broadcast %14 : vector<1x64xf32> to vector<16x64xf32>
    %17 = arith.addf %15, %16 : vector<16x64xf32>
    %18 = vector.extract_strided_slice %17 {offsets = [0, 0], sizes = [16, 32], strides = [1, 1]} : vector<16x64xf32> to vector<16x32xf32>
    %19 = vector.extract_strided_slice %17 {offsets = [0, 32], sizes = [16, 32], strides = [1, 1]} : vector<16x64xf32> to vector<16x32xf32>
    %20 = arith.addf %18, %19 : vector<16x32xf32>
    %21 = arith.negf %20 : vector<16x32xf32>
    %22 = math.exp %21 : vector<16x32xf32>
    %cst_17 = arith.constant 1.000000e+00 : f32
    %23 = vector.broadcast %cst_17 : f32 to vector<16x32xf32>
    %24 = arith.addf %23, %22 : vector<16x32xf32>
    %25 = arith.divf %23, %24 : vector<16x32xf32>
    %26 = arith.mulf %25, %19 : vector<16x32xf32>
    %cst_18 = arith.constant 1.000000e+00 : f32
    %27 = vector.broadcast %cst_18 : f32 to vector<16x32xf32>
    %28 = arith.subf %27, %25 : vector<16x32xf32>
    %29 = arith.mulf %28, %18 : vector<16x32xf32>
    %30 = arith.addf %26, %29 : vector<16x32xf32>
    %cst_19 = arith.constant 0.000000e+00 : f32
    %31 = vector.broadcast %cst_19 : f32 to vector<16x32xf32>
    %32 = arith.maximumf %30, %31 : vector<16x32xf32>
    %c1 = arith.constant 1 : index
    %c0_20 = arith.constant 0 : index
    %c0_21 = arith.constant 0 : index
    %33 = vector.load %arg3[%c1, %c0_20, %c0_21] : memref<7x32x32xf32, #tpu.memory_space<vmem>>, vector<1x32x32xf32>
    %34 = vector.shape_cast %33 : vector<1x32x32xf32> to vector<32x32xf32>
    %c1_22 = arith.constant 1 : index
    %c0_23 = arith.constant 0 : index
    %c0_24 = arith.constant 0 : index
    %35 = vector.load %arg4[%c1_22, %c0_23, %c0_24] : memref<7x1x32xf32, #tpu.memory_space<vmem>>, vector<1x1x32xf32>
    %36 = vector.shape_cast %35 : vector<1x1x32xf32> to vector<1x32xf32>
    %cst_25 = arith.constant dense<0.000000e+00> : vector<16x32xf32>
    %37 = tpu.matmul %32, %34, %cst_25 {dimension_numbers = #tpu.dot_dimension_numbers<[1], [0], [0], [1], [0, 0, 1, 1], [], []>} : vector<16x32xf32>, vector<32x32xf32>, vector<16x32xf32> -> vector<16x32xf32>
    %38 = vector.broadcast %36 : vector<1x32xf32> to vector<16x32xf32>
    %39 = arith.addf %37, %38 : vector<16x32xf32>
    %cst_26 = arith.constant dense<0.000000e+00> : vector<16x32xf32>
    %40 = tpu.matmul %0, %39, %cst_26 {dimension_numbers = #tpu.dot_dimension_numbers<[1], [0], [0], [1], [0, 0, 1, 1], [], []>} : vector<16x16xf32>, vector<16x32xf32>, vector<16x32xf32> -> vector<16x32xf32>
    %41 = tpu.concatenate %39, %40 in 1 : vector<16x32xf32>, vector<16x32xf32> -> vector<16x64xf32>
    %c1_27 = arith.constant 1 : index
    %c0_28 = arith.constant 0 : index
    %c0_29 = arith.constant 0 : index
    %42 = vector.load %arg5[%c1_27, %c0_28, %c0_29] : memref<3x64x64xf32, #tpu.memory_space<vmem>>, vector<1x64x64xf32>
    %43 = vector.shape_cast %42 : vector<1x64x64xf32> to vector<64x64xf32>
    %c1_30 = arith.constant 1 : index
    %c0_31 = arith.constant 0 : index
    %c0_32 = arith.constant 0 : index
    %44 = vector.load %arg6[%c1_30, %c0_31, %c0_32] : memref<3x1x64xf32, #tpu.memory_space<vmem>>, vector<1x1x64xf32>
    %45 = vector.shape_cast %44 : vector<1x1x64xf32> to vector<1x64xf32>
    %cst_33 = arith.constant dense<0.000000e+00> : vector<16x64xf32>
    %46 = tpu.matmul %41, %43, %cst_33 {dimension_numbers = #tpu.dot_dimension_numbers<[1], [0], [0], [1], [0, 0, 1, 1], [], []>} : vector<16x64xf32>, vector<64x64xf32>, vector<16x64xf32> -> vector<16x64xf32>
    %47 = vector.broadcast %45 : vector<1x64xf32> to vector<16x64xf32>
    %48 = arith.addf %46, %47 : vector<16x64xf32>
    %49 = vector.extract_strided_slice %48 {offsets = [0, 0], sizes = [16, 32], strides = [1, 1]} : vector<16x64xf32> to vector<16x32xf32>
    %50 = vector.extract_strided_slice %48 {offsets = [0, 32], sizes = [16, 32], strides = [1, 1]} : vector<16x64xf32> to vector<16x32xf32>
    %51 = arith.addf %49, %50 : vector<16x32xf32>
    %52 = arith.negf %51 : vector<16x32xf32>
    %53 = math.exp %52 : vector<16x32xf32>
    %cst_34 = arith.constant 1.000000e+00 : f32
    %54 = vector.broadcast %cst_34 : f32 to vector<16x32xf32>
    %55 = arith.addf %54, %53 : vector<16x32xf32>
    %56 = arith.divf %54, %55 : vector<16x32xf32>
    %57 = arith.mulf %56, %50 : vector<16x32xf32>
    %cst_35 = arith.constant 1.000000e+00 : f32
    %58 = vector.broadcast %cst_35 : f32 to vector<16x32xf32>
    %59 = arith.subf %58, %56 : vector<16x32xf32>
    %60 = arith.mulf %59, %49 : vector<16x32xf32>
    %61 = arith.addf %57, %60 : vector<16x32xf32>
    %cst_36 = arith.constant 0.000000e+00 : f32
    %62 = vector.broadcast %cst_36 : f32 to vector<16x32xf32>
    %63 = arith.maximumf %61, %62 : vector<16x32xf32>
    %c2 = arith.constant 2 : index
    %c0_37 = arith.constant 0 : index
    %c0_38 = arith.constant 0 : index
    %64 = vector.load %arg3[%c2, %c0_37, %c0_38] : memref<7x32x32xf32, #tpu.memory_space<vmem>>, vector<1x32x32xf32>
    %65 = vector.shape_cast %64 : vector<1x32x32xf32> to vector<32x32xf32>
    %c2_39 = arith.constant 2 : index
    %c0_40 = arith.constant 0 : index
    %c0_41 = arith.constant 0 : index
    %66 = vector.load %arg4[%c2_39, %c0_40, %c0_41] : memref<7x1x32xf32, #tpu.memory_space<vmem>>, vector<1x1x32xf32>
    %67 = vector.shape_cast %66 : vector<1x1x32xf32> to vector<1x32xf32>
    %cst_42 = arith.constant dense<0.000000e+00> : vector<16x32xf32>
    %68 = tpu.matmul %63, %65, %cst_42 {dimension_numbers = #tpu.dot_dimension_numbers<[1], [0], [0], [1], [0, 0, 1, 1], [], []>} : vector<16x32xf32>, vector<32x32xf32>, vector<16x32xf32> -> vector<16x32xf32>
    %69 = vector.broadcast %67 : vector<1x32xf32> to vector<16x32xf32>
    %70 = arith.addf %68, %69 : vector<16x32xf32>
    %cst_43 = arith.constant dense<0.000000e+00> : vector<16x32xf32>
    %71 = tpu.matmul %0, %70, %cst_43 {dimension_numbers = #tpu.dot_dimension_numbers<[1], [0], [0], [1], [0, 0, 1, 1], [], []>} : vector<16x16xf32>, vector<16x32xf32>, vector<16x32xf32> -> vector<16x32xf32>
    %72 = tpu.concatenate %70, %71 in 1 : vector<16x32xf32>, vector<16x32xf32> -> vector<16x64xf32>
    %c2_44 = arith.constant 2 : index
    %c0_45 = arith.constant 0 : index
    %c0_46 = arith.constant 0 : index
    %73 = vector.load %arg5[%c2_44, %c0_45, %c0_46] : memref<3x64x64xf32, #tpu.memory_space<vmem>>, vector<1x64x64xf32>
    %74 = vector.shape_cast %73 : vector<1x64x64xf32> to vector<64x64xf32>
    %c2_47 = arith.constant 2 : index
    %c0_48 = arith.constant 0 : index
    %c0_49 = arith.constant 0 : index
    %75 = vector.load %arg6[%c2_47, %c0_48, %c0_49] : memref<3x1x64xf32, #tpu.memory_space<vmem>>, vector<1x1x64xf32>
    %76 = vector.shape_cast %75 : vector<1x1x64xf32> to vector<1x64xf32>
    %cst_50 = arith.constant dense<0.000000e+00> : vector<16x64xf32>
    %77 = tpu.matmul %72, %74, %cst_50 {dimension_numbers = #tpu.dot_dimension_numbers<[1], [0], [0], [1], [0, 0, 1, 1], [], []>} : vector<16x64xf32>, vector<64x64xf32>, vector<16x64xf32> -> vector<16x64xf32>
    %78 = vector.broadcast %76 : vector<1x64xf32> to vector<16x64xf32>
    %79 = arith.addf %77, %78 : vector<16x64xf32>
    %80 = vector.extract_strided_slice %79 {offsets = [0, 0], sizes = [16, 32], strides = [1, 1]} : vector<16x64xf32> to vector<16x32xf32>
    %81 = vector.extract_strided_slice %79 {offsets = [0, 32], sizes = [16, 32], strides = [1, 1]} : vector<16x64xf32> to vector<16x32xf32>
    %82 = arith.addf %80, %81 : vector<16x32xf32>
    %83 = arith.negf %82 : vector<16x32xf32>
    %84 = math.exp %83 : vector<16x32xf32>
    %cst_51 = arith.constant 1.000000e+00 : f32
    %85 = vector.broadcast %cst_51 : f32 to vector<16x32xf32>
    %86 = arith.addf %85, %84 : vector<16x32xf32>
    %87 = arith.divf %85, %86 : vector<16x32xf32>
    %88 = arith.mulf %87, %81 : vector<16x32xf32>
    %cst_52 = arith.constant 1.000000e+00 : f32
    %89 = vector.broadcast %cst_52 : f32 to vector<16x32xf32>
    %90 = arith.subf %89, %87 : vector<16x32xf32>
    %91 = arith.mulf %90, %80 : vector<16x32xf32>
    %92 = arith.addf %88, %91 : vector<16x32xf32>
    %cst_53 = arith.constant 0.000000e+00 : f32
    %93 = vector.broadcast %cst_53 : f32 to vector<16x32xf32>
    %94 = arith.maximumf %92, %93 : vector<16x32xf32>
    %c3 = arith.constant 3 : index
    %c0_54 = arith.constant 0 : index
    %c0_55 = arith.constant 0 : index
    %95 = vector.load %arg3[%c3, %c0_54, %c0_55] : memref<7x32x32xf32, #tpu.memory_space<vmem>>, vector<1x32x32xf32>
    %96 = vector.shape_cast %95 : vector<1x32x32xf32> to vector<32x32xf32>
    %c3_56 = arith.constant 3 : index
    %c0_57 = arith.constant 0 : index
    %c0_58 = arith.constant 0 : index
    %97 = vector.load %arg4[%c3_56, %c0_57, %c0_58] : memref<7x1x32xf32, #tpu.memory_space<vmem>>, vector<1x1x32xf32>
    %98 = vector.shape_cast %97 : vector<1x1x32xf32> to vector<1x32xf32>
    %cst_59 = arith.constant dense<0.000000e+00> : vector<16x32xf32>
    %99 = tpu.matmul %94, %96, %cst_59 {dimension_numbers = #tpu.dot_dimension_numbers<[1], [0], [0], [1], [0, 0, 1, 1], [], []>} : vector<16x32xf32>, vector<32x32xf32>, vector<16x32xf32> -> vector<16x32xf32>
    %100 = vector.broadcast %98 : vector<1x32xf32> to vector<16x32xf32>
    %101 = arith.addf %99, %100 : vector<16x32xf32>
    %102 = vector.shape_cast %101 : vector<16x32xf32> to vector<2x8x32xf32>
    %cst_60 = arith.constant dense<0.000000e+00> : vector<2x32xf32>
    %103 = vector.multi_reduction <add>, %102, %cst_60 [1] : vector<2x8x32xf32> to vector<2x32xf32>
    %104 = arith.negf %103 : vector<2x32xf32>
    %105 = math.exp %104 : vector<2x32xf32>
    %cst_61 = arith.constant 1.000000e+00 : f32
    %106 = vector.broadcast %cst_61 : f32 to vector<2x32xf32>
    %107 = arith.addf %106, %105 : vector<2x32xf32>
    %108 = arith.divf %106, %107 : vector<2x32xf32>
    %c4 = arith.constant 4 : index
    %c0_62 = arith.constant 0 : index
    %c0_63 = arith.constant 0 : index
    %109 = vector.load %arg3[%c4, %c0_62, %c0_63] : memref<7x32x32xf32, #tpu.memory_space<vmem>>, vector<1x32x32xf32>
    %110 = vector.shape_cast %109 : vector<1x32x32xf32> to vector<32x32xf32>
    %c4_64 = arith.constant 4 : index
    %c0_65 = arith.constant 0 : index
    %c0_66 = arith.constant 0 : index
    %111 = vector.load %arg4[%c4_64, %c0_65, %c0_66] : memref<7x1x32xf32, #tpu.memory_space<vmem>>, vector<1x1x32xf32>
    %112 = vector.shape_cast %111 : vector<1x1x32xf32> to vector<1x32xf32>
    %cst_67 = arith.constant dense<0.000000e+00> : vector<2x32xf32>
    %113 = tpu.matmul %108, %110, %cst_67 {dimension_numbers = #tpu.dot_dimension_numbers<[1], [0], [0], [1], [0, 0, 1, 1], [], []>} : vector<2x32xf32>, vector<32x32xf32>, vector<2x32xf32> -> vector<2x32xf32>
    %114 = vector.broadcast %112 : vector<1x32xf32> to vector<2x32xf32>
    %115 = arith.addf %113, %114 : vector<2x32xf32>
    %cst_68 = arith.constant 0.000000e+00 : f32
    %116 = vector.broadcast %cst_68 : f32 to vector<2x32xf32>
    %117 = arith.maximumf %115, %116 : vector<2x32xf32>
    %c5 = arith.constant 5 : index
    %c0_69 = arith.constant 0 : index
    %c0_70 = arith.constant 0 : index
    %118 = vector.load %arg3[%c5, %c0_69, %c0_70] : memref<7x32x32xf32, #tpu.memory_space<vmem>>, vector<1x32x32xf32>
    %119 = vector.shape_cast %118 : vector<1x32x32xf32> to vector<32x32xf32>
    %c5_71 = arith.constant 5 : index
    %c0_72 = arith.constant 0 : index
    %c0_73 = arith.constant 0 : index
    %120 = vector.load %arg4[%c5_71, %c0_72, %c0_73] : memref<7x1x32xf32, #tpu.memory_space<vmem>>, vector<1x1x32xf32>
    %121 = vector.shape_cast %120 : vector<1x1x32xf32> to vector<1x32xf32>
    %cst_74 = arith.constant dense<0.000000e+00> : vector<2x32xf32>
    %122 = tpu.matmul %117, %119, %cst_74 {dimension_numbers = #tpu.dot_dimension_numbers<[1], [0], [0], [1], [0, 0, 1, 1], [], []>} : vector<2x32xf32>, vector<32x32xf32>, vector<2x32xf32> -> vector<2x32xf32>
    %123 = vector.broadcast %121 : vector<1x32xf32> to vector<2x32xf32>
    %124 = arith.addf %122, %123 : vector<2x32xf32>
    %125 = math.tanh %124 : vector<2x32xf32>
    %c6 = arith.constant 6 : index
    %c0_75 = arith.constant 0 : index
    %c0_76 = arith.constant 0 : index
    %126 = vector.load %arg3[%c6, %c0_75, %c0_76] : memref<7x32x32xf32, #tpu.memory_space<vmem>>, vector<1x32x32xf32>
    %127 = vector.shape_cast %126 : vector<1x32x32xf32> to vector<32x32xf32>
    %c6_77 = arith.constant 6 : index
    %c0_78 = arith.constant 0 : index
    %c0_79 = arith.constant 0 : index
    %128 = vector.load %arg4[%c6_77, %c0_78, %c0_79] : memref<7x1x32xf32, #tpu.memory_space<vmem>>, vector<1x1x32xf32>
    %129 = vector.shape_cast %128 : vector<1x1x32xf32> to vector<1x32xf32>
    %cst_80 = arith.constant dense<0.000000e+00> : vector<2x32xf32>
    %130 = tpu.matmul %125, %127, %cst_80 {dimension_numbers = #tpu.dot_dimension_numbers<[1], [0], [0], [1], [0, 0, 1, 1], [], []>} : vector<2x32xf32>, vector<32x32xf32>, vector<2x32xf32> -> vector<2x32xf32>
    %131 = vector.broadcast %129 : vector<1x32xf32> to vector<2x32xf32>
    %132 = arith.addf %130, %131 : vector<2x32xf32>
    %c0_i32 = arith.constant 0 : i32
    %133 = arith.sitofp %c0_i32 : i32 to f32
    %134 = vector.broadcast %133 : f32 to vector<2x96xf32>
    %135 = tpu.concatenate %132, %134 in 1 : vector<2x32xf32>, vector<2x96xf32> -> vector<2x128xf32>
    %c0_81 = arith.constant 0 : index
    %c0_82 = arith.constant 0 : index
    %c0_83 = arith.constant 0 : index
    %136 = vector.load %arg7[%c0_81, %c0_82, %c0_83] : memref<1x2x128xf32, #tpu.memory_space<vmem>>, vector<1x2x128xf32>
    %137 = vector.shape_cast %136 : vector<1x2x128xf32> to vector<2x128xf32>
    %138 = vector.shape_cast %135 : vector<2x128xf32> to vector<1x2x128xf32>
    tpu.vector_store %arg7[%c0_81, %c0_82, %c0_83], %138 {strides = array<i32>} : memref<1x2x128xf32, #tpu.memory_space<vmem>>, vector<1x2x128xf32>,
    return
  }
  func.func @transform_0(%arg0: i32) -> (i32, i32) {
    %c0_i32 = arith.constant 0 : i32
    %c0_i32_0 = arith.constant 0 : i32
    return %arg0, %c0_i32 : i32, i32
  }
  func.func @transform_1(%arg0: i32) -> (i32, i32) {
    %c0_i32 = arith.constant 0 : i32
    %c0_i32_0 = arith.constant 0 : i32
    return %arg0, %c0_i32 : i32, i32
  }
  func.func @transform_2(%arg0: i32) -> (i32, i32, i32) {
    %c0_i32 = arith.constant 0 : i32
    %c0_i32_0 = arith.constant 0 : i32
    %c0_i32_1 = arith.constant 0 : i32
    %c0_i32_2 = arith.constant 0 : i32
    return %c0_i32, %c0_i32_0, %c0_i32_1 : i32, i32, i32
  }
  func.func @transform_3(%arg0: i32) -> (i32, i32, i32) {
    %c0_i32 = arith.constant 0 : i32
    %c0_i32_0 = arith.constant 0 : i32
    %c0_i32_1 = arith.constant 0 : i32
    %c0_i32_2 = arith.constant 0 : i32
    return %c0_i32, %c0_i32_0, %c0_i32_1 : i32, i32, i32
  }
  func.func @transform_4(%arg0: i32) -> (i32, i32, i32) {
    %c0_i32 = arith.constant 0 : i32
    %c0_i32_0 = arith.constant 0 : i32
    %c0_i32_1 = arith.constant 0 : i32
    %c0_i32_2 = arith.constant 0 : i32
    return %c0_i32, %c0_i32_0, %c0_i32_1 : i32, i32, i32
  }
  func.func @transform_5(%arg0: i32) -> (i32, i32, i32) {
    %c0_i32 = arith.constant 0 : i32
    %c0_i32_0 = arith.constant 0 : i32
    %c0_i32_1 = arith.constant 0 : i32
    %c0_i32_2 = arith.constant 0 : i32
    return %c0_i32, %c0_i32_0, %c0_i32_1 : i32, i32, i32
  }
  func.func @transform_6(%arg0: i32) -> (i32, i32, i32) {
    %c0_i32 = arith.constant 0 : i32
    %c0_i32_0 = arith.constant 0 : i32
    %c0_i32_1 = arith.constant 0 : i32
    return %arg0, %c0_i32, %c0_i32_0 : i32, i32, i32
  }
}

</mosaic_0001>

<llo_original>
// kernel: gcn_forward.1
$region0: #{gcn_forward.1}
  #allocation0 [shape = 'u32[]', space=smem, size = 0x4, offset = 0x4, fixed_abs, tag = 'smem constant byte address 0x4 - core index']
  #allocation1 [shape = 'u32[144,128]{1,0:T(1,128)}', space=vmem, size = 0x12000, scoped, tag = 'internal scratch']
  %s0 = inlined_call_operand.vmem [shape: f32[16,32], index: 0, kind: input, shape index: {}]
  %s1 = inlined_call_operand.vmem [shape: f32[16,16], index: 1, kind: input, shape index: {}]
  %s2 = inlined_call_operand.hbm [shape: f32[7,32,32], index: 2, kind: input, shape index: {}]
  %s3 = inlined_call_operand.vmem [shape: f32[7,1,32], index: 3, kind: input, shape index: {}]
  %s4 = inlined_call_operand.hbm [shape: f32[3,64,64], index: 4, kind: input, shape index: {}]
  %s5 = inlined_call_operand.vmem [shape: f32[3,1,64], index: 5, kind: input, shape index: {}]
  %s6 = inlined_call_operand.vmem [shape: f32[1,2,128], index: 6, kind: output, shape index: {}]
  %s7 = sld [smem:[#allocation0]]
  $region42: #{gcn_forward.1} parent=0
    _
  %s9 = ssub.s32 1, %s7
  %s10 = scalar_select 0, %s9, %s7
  $region1: #{gcn_forward.1} parent=0
    #allocation2 [shape = 'u8[114688]{0}', space=vmem, size = 0x1c000, scoped, tag = 'input window, operand 2, single buffered']
    #allocation3 [shape = 's32[1]{0}', space=sflag, size = 0x4, scoped, tag = 'scoped memory for gcn_forward.1']
    #allocation4 [shape = 'u8[98304]{0}', space=vmem, size = 0x18000, scoped, tag = 'input window, operand 4, single buffered']
    #allocation5 [shape = 's32[1]{0}', space=sflag, size = 0x4, scoped, tag = 'scoped memory for gcn_forward.1']
    %11 = vsyncpa [#allocation3], 0
    %12 = vsyncpa [#allocation5], 0
    // Predicated region
    $region2: #{gcn_forward.1} parent=1 // pred_check
      _
    $region3: #{gcn_forward.1} parent=1 // pred_check_branch
      %14 = sbr.rel (0) target = $region5
    $region4: #{gcn_forward.1} parent=1 // pred_region
      _
    $region5: #{gcn_forward.1} parent=1 // pred_fallthru
      _
    // Predicated region
    $region6: #{gcn_forward.1} parent=1 // pred_check
      _
    $region7: #{gcn_forward.1} parent=1 // pred_check_branch
      %16 = sbr.rel (0) target = $region9
    $region8: #{gcn_forward.1} parent=1 // pred_region
      _
    $region9: #{gcn_forward.1} parent=1 // pred_fallthru
      _
    // Predicated region
    $region10: #{gcn_forward.1} parent=1 // pred_check
      _
    $region11: #{gcn_forward.1} parent=1 // pred_check_branch
      %18 = sbr.rel (0) target = $region13
    $region12: #{gcn_forward.1} parent=1 // pred_region
      %s20 = ssub.s32 3584, 3584
      %21 = vsyncadd [#allocation3], %s20
      %s22 = sshll.u32 [#allocation2], 4
      %s23 = int_to_ptr.vmem [resolvable:$true] %s22
      %28 = dma.hbm_to_vmem [thread:$0]  %s2, 3584, %s23, [#allocation3], 128, 128, 8
    $region13: #{gcn_forward.1} parent=1 // pred_fallthru
      _
    // Predicated region
    $region14: #{gcn_forward.1} parent=1 // pred_check
      _
    $region15: #{gcn_forward.1} parent=1 // pred_check_branch
      %30 = sbr.rel (0) target = $region17
    $region16: #{gcn_forward.1} parent=1 // pred_region
      _
    $region17: #{gcn_forward.1} parent=1 // pred_fallthru
      _
    // Predicated region
    $region18: #{gcn_forward.1} parent=1 // pred_check
      _
    $region19: #{gcn_forward.1} parent=1 // pred_check_branch
      %32 = sbr.rel (0) target = $region21
    $region20: #{gcn_forward.1} parent=1 // pred_region
      %s34 = ssub.s32 3072, 3072
      %35 = vsyncadd [#allocation5], %s34
      %s36 = sshll.u32 [#allocation4], 4
      %s37 = int_to_ptr.vmem [resolvable:$true] %s36
      %42 = dma.hbm_to_vmem [thread:$0]  %s4, 3072, %s37, [#allocation5], 128, 128, 8
    $region21: #{gcn_forward.1} parent=1 // pred_fallthru
      _
    // Predicated region
    $region22: #{gcn_forward.1} parent=1 // pred_check
      _
    $region23: #{gcn_forward.1} parent=1 // pred_check_branch
      %44 = sbr.rel (0) target = $region25
    $region24: #{gcn_forward.1} parent=1 // pred_region
      _
    $region25: #{gcn_forward.1} parent=1 // pred_fallthru
      _
    // Predicated region
    $region26: #{gcn_forward.1} parent=1 // pred_check
      _
    $region27: #{gcn_forward.1} parent=1 // pred_check_branch
      %46 = sbr.rel (0) target = $region29
    $region28: #{gcn_forward.1} parent=1 // pred_region
      %47 = dma.done [#allocation3], 3584
    $region29: #{gcn_forward.1} parent=1 // pred_fallthru
      _
    // Predicated region
    $region30: #{gcn_forward.1} parent=1 // pred_check
      _
    $region31: #{gcn_forward.1} parent=1 // pred_check_branch
      %49 = sbr.rel (0) target = $region33
    $region32: #{gcn_forward.1} parent=1 // pred_region
      %50 = dma.done [#allocation5], 3072
    $region33: #{gcn_forward.1} parent=1 // pred_fallthru
      _
    %v51 = vld [vmem:[%s1] sm:$0xff]
    %v52 = vld [vmem:[%s1 + $0x8] sm:$0xff]
    %v53 = vld [vmem:[%s0] sm:$0xff]
    %v54 = vld [vmem:[%s0 + $0x8] sm:$0xff]
    %v55 = vld [vmem:[#allocation2] sm:$0xff]
    %v56 = vld [vmem:[#allocation2 + $0x8] sm:$0xff]
    %v57 = vld [vmem:[#allocation2 + $0x10] sm:$0xff]
    %v58 = vld [vmem:[#allocation2 + $0x18] sm:$0xff]
    %v59 = vld [vmem:[%s3] sm:$0x1]
    %v61 = vlaneseq
    %v62 = vshrl.u32 %v61, 7
    %v63 = vsub.s32 0, %v62
    %v64 = vrot.slane %v59, %v63
    %vm66 = vcmask 261120
    %v68 = vsel %vm66, %v53, 0
    %v71 = vsel %vm66, %v54, 0
    %73 = vmatprep.subr.mxu0 0.0
    %74 = vmatpush1.msra.mxu0 0.0
    %75 = vmatprep.subr.mxu0 0.0
    %76 = vmatpush1.msra.mxu0 0.0
    %77 = vmatprep.subr.mxu0 0.0
    %78 = vmatpush1.msra.mxu0 0.0
    %79 = vmatprep.subr.mxu0 0.0
    %80 = vmatpush1.msra.mxu0 0.0
    %81 = vmatprep.subr.mxu0 0.0
    %82 = vmatpush1.msra.mxu0 0.0
    %83 = vmatprep.subr.mxu0 0.0
    %84 = vmatpush1.msra.mxu0 0.0
    %85 = vmatprep.subr.mxu0 0.0
    %86 = vmatpush1.msra.mxu0 0.0
    %87 = vmatprep.subr.mxu0 0.0
    %88 = vmatpush1.msra.mxu0 0.0
    %89 = vmatprep.subr.mxu0 0.0
    %90 = vmatpush1.msra.mxu0 0.0
    %91 = vmatprep.subr.mxu0 0.0
    %92 = vmatpush1.msra.mxu0 0.0
    %93 = vmatprep.subr.mxu0 0.0
    %94 = vmatpush1.msra.mxu0 0.0
    %95 = vmatprep.subr.mxu0 0.0
    %96 = vmatpush1.msra.mxu0 0.0
    %97 = vmatprep.subr.mxu0 0.0
    %98 = vmatpush1.msra.mxu0 %v58
    %99 = vmatprep.subr.mxu0 0.0
    %100 = vmatpush1.msra.mxu0 %v57
    %101 = vmatprep.subr.mxu0 0.0
    %102 = vmatpush1.msra.mxu0 %v56
    %103 = vmatprep.subr.mxu0 0.0
    %104 = vmatpush1.msra.mxu0 %v55
    %105 = vmatprep.subr.mxu0 0.0
    %106 = vmatpush2.msra.mxu0 0.0
    %107 = vmatprep.subr.mxu0 0.0
    %108 = vmatpush2.msra.mxu0 0.0
    %109 = vmatprep.subr.mxu0 0.0
    %110 = vmatpush2.msra.mxu0 0.0
    %111 = vmatprep.subr.mxu0 0.0
    %112 = vmatpush2.msra.mxu0 0.0
    %113 = vmatprep.subr.mxu0 0.0
    %114 = vmatpush2.msra.mxu0 0.0
    %115 = vmatprep.subr.mxu0 0.0
    %116 = vmatpush2.msra.mxu0 0.0
    %117 = vmatprep.subr.mxu0 0.0
    %118 = vmatpush2.msra.mxu0 0.0
    %119 = vmatprep.subr.mxu0 0.0
    %120 = vmatpush2.msra.mxu0 0.0
    %121 = vmatprep.subr.mxu0 0.0
    %122 = vmatpush2.msra.mxu0 0.0
    %123 = vmatprep.subr.mxu0 0.0
    %124 = vmatpush2.msra.mxu0 0.0
    %125 = vmatprep.subr.mxu0 0.0
    %126 = vmatpush2.msra.mxu0 0.0
    %127 = vmatprep.subr.mxu0 0.0
    %128 = vmatpush2.msra.mxu0 0.0
    %129 = vmatprep.subr.mxu0 0.0
    %130 = vmatpush2.msra.mxu0 0.0
    %131 = vmatprep.subr.mxu0 0.0
    %132 = vmatpush2.msra.mxu0 0.0
    %133 = vmatprep.subr.mxu0 0.0
    %134 = vmatpush2.msra.mxu0 0.0
    %135 = vmatprep.subr.mxu0 0.0
    %136 = vmatpush2.msra.mxu0 0.0
    %137 = vmatprep.mubr.f32.mxu0 0.0
    %138 = vmatmul.mubr.f32.gmra.mxu0 %v68
    %v139 = vpop.f32.mrf.mxu0
    %v140 = vadd.f32 %v64, %v139
    %v141 = vpop.f32.mrf.mxu0
    %142 = vmatprep.mubr.f32.mxu0 0.0
    %143 = vmatmul.mubr.f32.gmra.mxu0 %v71
    %v144 = vpop.f32.mrf.mxu0
    %v145 = vadd.f32 %v64, %v144
    %v146 = vpop.f32.mrf.mxu0
    %147 = vdwg.mxu0
    %vm148 = vcmask 130048
    %v150 = vsel %vm148, %v51, 0
    %v153 = vsel %vm148, %v52, 0
    %155 = vmatprep.subr.mxu0 0.0
    %156 = vmatpush1.msra.mxu0 0.0
    %157 = vmatprep.subr.mxu0 0.0
    %158 = vmatpush1.msra.mxu0 0.0
    %159 = vmatprep.subr.mxu0 0.0
    %160 = vmatpush1.msra.mxu0 0.0
    %161 = vmatprep.subr.mxu0 0.0
    %162 = vmatpush1.msra.mxu0 0.0
    %163 = vmatprep.subr.mxu0 0.0
    %164 = vmatpush1.msra.mxu0 0.0
    %165 = vmatprep.subr.mxu0 0.0
    %166 = vmatpush1.msra.mxu0 0.0
    %167 = vmatprep.subr.mxu0 0.0
    %168 = vmatpush1.msra.mxu0 0.0
    %169 = vmatprep.subr.mxu0 0.0
    %170 = vmatpush1.msra.mxu0 0.0
    %171 = vmatprep.subr.mxu0 0.0
    %172 = vmatpush1.msra.mxu0 0.0
    %173 = vmatprep.subr.mxu0 0.0
    %174 = vmatpush1.msra.mxu0 0.0
    %175 = vmatprep.subr.mxu0 0.0
    %176 = vmatpush1.msra.mxu0 0.0
    %177 = vmatprep.subr.mxu0 0.0
    %178 = vmatpush1.msra.mxu0 0.0
    %179 = vmatprep.subr.mxu0 0.0
    %180 = vmatpush1.msra.mxu0 0.0
    %181 = vmatprep.subr.mxu0 0.0
    %182 = vmatpush1.msra.mxu0 0.0
    %183 = vmatprep.subr.mxu0 0.0
    %184 = vmatpush1.msra.mxu0 %v145
    %185 = vmatprep.subr.mxu0 0.0
    %186 = vmatpush1.msra.mxu0 %v140
    %187 = vmatprep.subr.mxu0 0.0
    %188 = vmatpush2.msra.mxu0 0.0
    %189 = vmatprep.subr.mxu0 0.0
    %190 = vmatpush2.msra.mxu0 0.0
    %191 = vmatprep.subr.mxu0 0.0
    %192 = vmatpush2.msra.mxu0 0.0
    %193 = vmatprep.subr.mxu0 0.0
    %194 = vmatpush2.msra.mxu0 0.0
    %195 = vmatprep.subr.mxu0 0.0
    %196 = vmatpush2.msra.mxu0 0.0
    %197 = vmatprep.subr.mxu0 0.0
    %198 = vmatpush2.msra.mxu0 0.0
    %199 = vmatprep.subr.mxu0 0.0
    %200 = vmatpush2.msra.mxu0 0.0
    %201 = vmatprep.subr.mxu0 0.0
    %202 = vmatpush2.msra.mxu0 0.0
    %203 = vmatprep.subr.mxu0 0.0
    %204 = vmatpush2.msra.mxu0 0.0
    %205 = vmatprep.subr.mxu0 0.0
    %206 = vmatpush2.msra.mxu0 0.0
    %207 = vmatprep.subr.mxu0 0.0
    %208 = vmatpush2.msra.mxu0 0.0
    %209 = vmatprep.subr.mxu0 0.0
    %210 = vmatpush2.msra.mxu0 0.0
    %211 = vmatprep.subr.mxu0 0.0
    %212 = vmatpush2.msra.mxu0 0.0
    %213 = vmatprep.subr.mxu0 0.0
    %214 = vmatpush2.msra.mxu0 0.0
    %215 = vmatprep.subr.mxu0 0.0
    %216 = vmatpush2.msra.mxu0 0.0
    %217 = vmatprep.subr.mxu0 0.0
    %218 = vmatpush2.msra.mxu0 0.0
    %219 = vmatprep.mubr.f32.mxu0 0.0
    %220 = vmatmul.mubr.f32.gmra.mxu0 %v150
    %v221 = vpop.f32.mrf.mxu0
    %v222 = vadd.f32 0.0, %v221
    %v223 = vpop.f32.mrf.mxu0
    %224 = vmatprep.mubr.f32.mxu0 0.0
    %225 = vmatmul.mubr.f32.gmra.mxu0 %v153
    %v226 = vpop.f32.mrf.mxu0
    %v227 = vadd.f32 0.0, %v226
    %v228 = vpop.f32.mrf.mxu0
    %229 = vdwg.mxu0
    %232 = vrot.lane.b32.xlu0 %v222, 32
    %v233 = vpop.permute.xlu0 %232
    %234 = vrot.lane.b32.xlu0 %v227, 32
    %v235 = vpop.permute.xlu0 %234
    %v238 = vsel %vm66, %v140, %v233
    %v239 = vsel %vm66, %v145, %v235
    %v240 = vld [vmem:[#allocation4] sm:$0xff]
    %v241 = vld [vmem:[#allocation4 + $0x8] sm:$0xff]
    %v242 = vld [vmem:[#allocation4 + $0x10] sm:$0xff]
    %v243 = vld [vmem:[#allocation4 + $0x18] sm:$0xff]
    %v244 = vld [vmem:[#allocation4 + $0x20] sm:$0xff]
    %v245 = vld [vmem:[#allocation4 + $0x28] sm:$0xff]
    %v246 = vld [vmem:[#allocation4 + $0x30] sm:$0xff]
    %v247 = vld [vmem:[#allocation4 + $0x38] sm:$0xff]
    %v248 = vld [vmem:[%s5] sm:$0x1]
    %v250 = vlaneseq
    %v251 = vshrl.u32 %v250, 7
    %v252 = vsub.s32 0, %v251
    %v253 = vrot.slane %v248, %v252
    %vm255 = vcmask 523264
    %v257 = vsel %vm255, %v238, 0
    %v260 = vsel %vm255, %v239, 0
    %262 = vmatprep.subr.mxu0 0.0
    %263 = vmatpush1.msra.mxu0 0.0
    %264 = vmatprep.subr.mxu0 0.0
    %265 = vmatpush1.msra.mxu0 0.0
    %266 = vmatprep.subr.mxu0 0.0
    %267 = vmatpush1.msra.mxu0 0.0
    %268 = vmatprep.subr.mxu0 0.0
    %269 = vmatpush1.msra.mxu0 0.0
    %270 = vmatprep.subr.mxu0 0.0
    %271 = vmatpush1.msra.mxu0 0.0
    %272 = vmatprep.subr.mxu0 0.0
    %273 = vmatpush1.msra.mxu0 0.0
    %274 = vmatprep.subr.mxu0 0.0
    %275 = vmatpush1.msra.mxu0 0.0
    %276 = vmatprep.subr.mxu0 0.0
    %277 = vmatpush1.msra.mxu0 0.0
    %278 = vmatprep.subr.mxu0 0.0
    %279 = vmatpush1.msra.mxu0 %v247
    %280 = vmatprep.subr.mxu0 0.0
    %281 = vmatpush1.msra.mxu0 %v246
    %282 = vmatprep.subr.mxu0 0.0
    %283 = vmatpush1.msra.mxu0 %v245
    %284 = vmatprep.subr.mxu0 0.0
    %285 = vmatpush1.msra.mxu0 %v244
    %286 = vmatprep.subr.mxu0 0.0
    %287 = vmatpush1.msra.mxu0 %v243
    %288 = vmatprep.subr.mxu0 0.0
    %289 = vmatpush1.msra.mxu0 %v242
    %290 = vmatprep.subr.mxu0 0.0
    %291 = vmatpush1.msra.mxu0 %v241
    %292 = vmatprep.subr.mxu0 0.0
    %293 = vmatpush1.msra.mxu0 %v240
    %294 = vmatprep.subr.mxu0 0.0
    %295 = vmatpush2.msra.mxu0 0.0
    %296 = vmatprep.subr.mxu0 0.0
    %297 = vmatpush2.msra.mxu0 0.0
    %298 = vmatprep.subr.mxu0 0.0
    %299 = vmatpush2.msra.mxu0 0.0
    %300 = vmatprep.subr.mxu0 0.0
    %301 = vmatpush2.msra.mxu0 0.0
    %302 = vmatprep.subr.mxu0 0.0
    %303 = vmatpush2.msra.mxu0 0.0
    %304 = vmatprep.subr.mxu0 0.0
    %305 = vmatpush2.msra.mxu0 0.0
    %306 = vmatprep.subr.mxu0 0.0
    %307 = vmatpush2.msra.mxu0 0.0
    %308 = vmatprep.subr.mxu0 0.0
    %309 = vmatpush2.msra.mxu0 0.0
    %310 = vmatprep.subr.mxu0 0.0
    %311 = vmatpush2.msra.mxu0 0.0
    %312 = vmatprep.subr.mxu0 0.0
    %313 = vmatpush2.msra.mxu0 0.0
    %314 = vmatprep.subr.mxu0 0.0
    %315 = vmatpush2.msra.mxu0 0.0
    %316 = vmatprep.subr.mxu0 0.0
    %317 = vmatpush2.msra.mxu0 0.0
    %318 = vmatprep.subr.mxu0 0.0
    %319 = vmatpush2.msra.mxu0 0.0
    %320 = vmatprep.subr.mxu0 0.0
    %321 = vmatpush2.msra.mxu0 0.0
    %322 = vmatprep.subr.mxu0 0.0
    %323 = vmatpush2.msra.mxu0 0.0
    %324 = vmatprep.subr.mxu0 0.0
    %325 = vmatpush2.msra.mxu0 0.0
    %326 = vmatprep.mubr.f32.mxu0 0.0
    %327 = vmatmul.mubr.f32.gmra.mxu0 %v257
    %v328 = vpop.f32.mrf.mxu0
    %v329 = vadd.f32 %v253, %v328
    %v330 = vpop.f32.mrf.mxu0
    %331 = vmatprep.mubr.f32.mxu0 0.0
    %332 = vmatmul.mubr.f32.gmra.mxu0 %v260
    %v333 = vpop.f32.mrf.mxu0
    %v334 = vadd.f32 %v253, %v333
    %v335 = vpop.f32.mrf.mxu0
    %336 = vdwg.mxu0
    %339 = vrot.lane.b32.xlu0 %v329, 96
    %v340 = vpop.permute.xlu0 %339
    %341 = vrot.lane.b32.xlu0 %v334, 96
    %v342 = vpop.permute.xlu0 %341
    %v345 = vadd.f32 %v329, %v340
    %v346 = vadd.f32 %v334, %v342
    %v347 = vxor.u32 %v345, 2147483648
    %v348 = vxor.u32 %v346, 2147483648
    %v349 = vmul.f32 %v347, 1.442695
    %v350 = vpow.pop %v349
    %v351 = vmul.f32 %v348, 1.442695
    %v352 = vpow.pop %v351
    %v353 = vadd.f32 %v350, 1.0
    %v354 = vadd.f32 %v352, 1.0
    %v355 = vrcp.pop %v353
    %v356 = vmul.f32 1.0, %v355
    %v357 = vrcp.pop %v354
    %v358 = vmul.f32 1.0, %v357
    %v359 = vmul.f32 %v356, %v340
    %v360 = vmul.f32 %v358, %v342
    %v361 = vsub.f32 1.0, %v356
    %v362 = vsub.f32 1.0, %v358
    %v363 = vmul.f32 %v361, %v329
    %v364 = vmul.f32 %v362, %v334
    %v365 = vadd.f32 %v359, %v363
    %v366 = vadd.f32 %v360, %v364
    %v367 = vmax.f32 %v365, 0.0
    %v368 = vmax.f32 %v366, 0.0
    %s369 = scalar_lea.vmem [#allocation2], 32
    %v370 = vld [vmem:[%s369] sm:$0xff]
    %v371 = vld [vmem:[%s369 + $0x8] sm:$0xff]
    %v372 = vld [vmem:[%s369 + $0x10] sm:$0xff]
    %v373 = vld [vmem:[%s369 + $0x18] sm:$0xff]
    %s374 = scalar_lea.vmem %s3, 1
    %v375 = vld [vmem:[%s374] sm:$0x1]
    %v377 = vlaneseq
    %v378 = vshrl.u32 %v377, 7
    %v379 = vsub.s32 0, %v378
    %v380 = vrot.slane %v375, %v379
    %v383 = vsel %vm66, %v367, 0
    %v386 = vsel %vm66, %v368, 0
    %388 = vmatprep.subr.mxu0 0.0
    %389 = vmatpush1.msra.mxu0 0.0
    %390 = vmatprep.subr.mxu0 0.0
    %391 = vmatpush1.msra.mxu0 0.0
    %392 = vmatprep.subr.mxu0 0.0
    %393 = vmatpush1.msra.mxu0 0.0
    %394 = vmatprep.subr.mxu0 0.0
    %395 = vmatpush1.msra.mxu0 0.0
    %396 = vmatprep.subr.mxu0 0.0
    %397 = vmatpush1.msra.mxu0 0.0
    %398 = vmatprep.subr.mxu0 0.0
    %399 = vmatpush1.msra.mxu0 0.0
    %400 = vmatprep.subr.mxu0 0.0
    %401 = vmatpush1.msra.mxu0 0.0
    %402 = vmatprep.subr.mxu0 0.0
    %403 = vmatpush1.msra.mxu0 0.0
    %404 = vmatprep.subr.mxu0 0.0
    %405 = vmatpush1.msra.mxu0 0.0
    %406 = vmatprep.subr.mxu0 0.0
    %407 = vmatpush1.msra.mxu0 0.0
    %408 = vmatprep.subr.mxu0 0.0
    %409 = vmatpush1.msra.mxu0 0.0
    %410 = vmatprep.subr.mxu0 0.0
    %411 = vmatpush1.msra.mxu0 0.0
    %412 = vmatprep.subr.mxu0 0.0
    %413 = vmatpush1.msra.mxu0 %v373
    %414 = vmatprep.subr.mxu0 0.0
    %415 = vmatpush1.msra.mxu0 %v372
    %416 = vmatprep.subr.mxu0 0.0
    %417 = vmatpush1.msra.mxu0 %v371
    %418 = vmatprep.subr.mxu0 0.0
    %419 = vmatpush1.msra.mxu0 %v370
    %420 = vmatprep.subr.mxu0 0.0
    %421 = vmatpush2.msra.mxu0 0.0
    %422 = vmatprep.subr.mxu0 0.0
    %423 = vmatpush2.msra.mxu0 0.0
    %424 = vmatprep.subr.mxu0 0.0
    %425 = vmatpush2.msra.mxu0 0.0
    %426 = vmatprep.subr.mxu0 0.0
    %427 = vmatpush2.msra.mxu0 0.0
    %428 = vmatprep.subr.mxu0 0.0
    %429 = vmatpush2.msra.mxu0 0.0
    %430 = vmatprep.subr.mxu0 0.0
    %431 = vmatpush2.msra.mxu0 0.0
    %432 = vmatprep.subr.mxu0 0.0
    %433 = vmatpush2.msra.mxu0 0.0
    %434 = vmatprep.subr.mxu0 0.0
    %435 = vmatpush2.msra.mxu0 0.0
    %436 = vmatprep.subr.mxu0 0.0
    %437 = vmatpush2.msra.mxu0 0.0
    %438 = vmatprep.subr.mxu0 0.0
    %439 = vmatpush2.msra.mxu0 0.0
    %440 = vmatprep.subr.mxu0 0.0
    %441 = vmatpush2.msra.mxu0 0.0
    %442 = vmatprep.subr.mxu0 0.0
    %443 = vmatpush2.msra.mxu0 0.0
    %444 = vmatprep.subr.mxu0 0.0
    %445 = vmatpush2.msra.mxu0 0.0
    %446 = vmatprep.subr.mxu0 0.0
    %447 = vmatpush2.msra.mxu0 0.0
    %448 = vmatprep.subr.mxu0 0.0
    %449 = vmatpush2.msra.mxu0 0.0
    %450 = vmatprep.subr.mxu0 0.0
    %451 = vmatpush2.msra.mxu0 0.0
    %452 = vmatprep.mubr.f32.mxu0 0.0
    %453 = vmatmul.mubr.f32.gmra.mxu0 %v383
    %v454 = vpop.f32.mrf.mxu0
    %v455 = vadd.f32 %v380, %v454
    %v456 = vpop.f32.mrf.mxu0
    %457 = vmatprep.mubr.f32.mxu0 0.0
    %458 = vmatmul.mubr.f32.gmra.mxu0 %v386
    %v459 = vpop.f32.mrf.mxu0
    %v460 = vadd.f32 %v380, %v459
    %v461 = vpop.f32.mrf.mxu0
    %462 = vdwg.mxu0
    %463 = vmatprep.subr.mxu0 0.0
    %464 = vmatpush1.msra.mxu0 0.0
    %465 = vmatprep.subr.mxu0 0.0
    %466 = vmatpush1.msra.mxu0 0.0
    %467 = vmatprep.subr.mxu0 0.0
    %468 = vmatpush1.msra.mxu0 0.0
    %469 = vmatprep.subr.mxu0 0.0
    %470 = vmatpush1.msra.mxu0 0.0
    %471 = vmatprep.subr.mxu0 0.0
    %472 = vmatpush1.msra.mxu0 0.0
    %473 = vmatprep.subr.mxu0 0.0
    %474 = vmatpush1.msra.mxu0 0.0
    %475 = vmatprep.subr.mxu0 0.0
    %476 = vmatpush1.msra.mxu0 0.0
    %477 = vmatprep.subr.mxu0 0.0
    %478 = vmatpush1.msra.mxu0 0.0
    %479 = vmatprep.subr.mxu0 0.0
    %480 = vmatpush1.msra.mxu0 0.0
    %481 = vmatprep.subr.mxu0 0.0
    %482 = vmatpush1.msra.mxu0 0.0
    %483 = vmatprep.subr.mxu0 0.0
    %484 = vmatpush1.msra.mxu0 0.0
    %485 = vmatprep.subr.mxu0 0.0
    %486 = vmatpush1.msra.mxu0 0.0
    %487 = vmatprep.subr.mxu0 0.0
    %488 = vmatpush1.msra.mxu0 0.0
    %489 = vmatprep.subr.mxu0 0.0
    %490 = vmatpush1.msra.mxu0 0.0
    %491 = vmatprep.subr.mxu0 0.0
    %492 = vmatpush1.msra.mxu0 %v460
    %493 = vmatprep.subr.mxu0 0.0
    %494 = vmatpush1.msra.mxu0 %v455
    %495 = vmatprep.subr.mxu0 0.0
    %496 = vmatpush2.msra.mxu0 0.0
    %497 = vmatprep.subr.mxu0 0.0
    %498 = vmatpush2.msra.mxu0 0.0
    %499 = vmatprep.subr.mxu0 0.0
    %500 = vmatpush2.msra.mxu0 0.0
    %501 = vmatprep.subr.mxu0 0.0
    %502 = vmatpush2.msra.mxu0 0.0
    %503 = vmatprep.subr.mxu0 0.0
    %504 = vmatpush2.msra.mxu0 0.0
    %505 = vmatprep.subr.mxu0 0.0
    %506 = vmatpush2.msra.mxu0 0.0
    %507 = vmatprep.subr.mxu0 0.0
    %508 = vmatpush2.msra.mxu0 0.0
    %509 = vmatprep.subr.mxu0 0.0
    %510 = vmatpush2.msra.mxu0 0.0
    %511 = vmatprep.subr.mxu0 0.0
    %512 = vmatpush2.msra.mxu0 0.0
    %513 = vmatprep.subr.mxu0 0.0
    %514 = vmatpush2.msra.mxu0 0.0
    %515 = vmatprep.subr.mxu0 0.0
    %516 = vmatpush2.msra.mxu0 0.0
    %517 = vmatprep.subr.mxu0 0.0
    %518 = vmatpush2.msra.mxu0 0.0
    %519 = vmatprep.subr.mxu0 0.0
    %520 = vmatpush2.msra.mxu0 0.0
    %521 = vmatprep.subr.mxu0 0.0
    %522 = vmatpush2.msra.mxu0 0.0
    %523 = vmatprep.subr.mxu0 0.0
    %524 = vmatpush2.msra.mxu0 0.0
    %525 = vmatprep.subr.mxu0 0.0
    %526 = vmatpush2.msra.mxu0 0.0
    %527 = vmatprep.mubr.f32.mxu0 0.0
    %528 = vmatmul.mubr.f32.gmra.mxu0 %v150
    %v529 = vpop.f32.mrf.mxu0
    %v530 = vadd.f32 0.0, %v529
    %v531 = vpop.f32.mrf.mxu0
    %532 = vmatprep.mubr.f32.mxu0 0.0
    %533 = vmatmul.mubr.f32.gmra.mxu0 %v153
    %v534 = vpop.f32.mrf.mxu0
    %v535 = vadd.f32 0.0, %v534
    %v536 = vpop.f32.mrf.mxu0
    %537 = vdwg.mxu0
    %540 = vrot.lane.b32.xlu0 %v530, 32
    %v541 = vpop.permute.xlu0 %540
    %542 = vrot.lane.b32.xlu0 %v535, 32
    %v543 = vpop.permute.xlu0 %542
    %v546 = vsel %vm66, %v455, %v541
    %v547 = vsel %vm66, %v460, %v543
    %s548 = scalar_lea.vmem [#allocation4], 64
    %v549 = vld [vmem:[%s548] sm:$0xff]
    %v550 = vld [vmem:[%s548 + $0x8] sm:$0xff]
    %v551 = vld [vmem:[%s548 + $0x10] sm:$0xff]
    %v552 = vld [vmem:[%s548 + $0x18] sm:$0xff]
    %v553 = vld [vmem:[%s548 + $0x20] sm:$0xff]
    %v554 = vld [vmem:[%s548 + $0x28] sm:$0xff]
    %v555 = vld [vmem:[%s548 + $0x30] sm:$0xff]
    %v556 = vld [vmem:[%s548 + $0x38] sm:$0xff]
    %s557 = scalar_lea.vmem %s5, 1
    %v558 = vld [vmem:[%s557] sm:$0x1]
    %v560 = vlaneseq
    %v561 = vshrl.u32 %v560, 7
    %v562 = vsub.s32 0, %v561
    %v563 = vrot.slane %v558, %v562
    %v566 = vsel %vm255, %v546, 0
    %v569 = vsel %vm255, %v547, 0
    %571 = vmatprep.subr.mxu0 0.0
    %572 = vmatpush1.msra.mxu0 0.0
    %573 = vmatprep.subr.mxu0 0.0
    %574 = vmatpush1.msra.mxu0 0.0
    %575 = vmatprep.subr.mxu0 0.0
    %576 = vmatpush1.msra.mxu0 0.0
    %577 = vmatprep.subr.mxu0 0.0
    %578 = vmatpush1.msra.mxu0 0.0
    %579 = vmatprep.subr.mxu0 0.0
    %580 = vmatpush1.msra.mxu0 0.0
    %581 = vmatprep.subr.mxu0 0.0
    %582 = vmatpush1.msra.mxu0 0.0
    %583 = vmatprep.subr.mxu0 0.0
    %584 = vmatpush1.msra.mxu0 0.0
    %585 = vmatprep.subr.mxu0 0.0
    %586 = vmatpush1.msra.mxu0 0.0
    %587 = vmatprep.subr.mxu0 0.0
    %588 = vmatpush1.msra.mxu0 %v556
    %589 = vmatprep.subr.mxu0 0.0
    %590 = vmatpush1.msra.mxu0 %v555
    %591 = vmatprep.subr.mxu0 0.0
    %592 = vmatpush1.msra.mxu0 %v554
    %593 = vmatprep.subr.mxu0 0.0
    %594 = vmatpush1.msra.mxu0 %v553
    %595 = vmatprep.subr.mxu0 0.0
    %596 = vmatpush1.msra.mxu0 %v552
    %597 = vmatprep.subr.mxu0 0.0
    %598 = vmatpush1.msra.mxu0 %v551
    %599 = vmatprep.subr.mxu0 0.0
    %600 = vmatpush1.msra.mxu0 %v550
    %601 = vmatprep.subr.mxu0 0.0
    %602 = vmatpush1.msra.mxu0 %v549
    %603 = vmatprep.subr.mxu0 0.0
    %604 = vmatpush2.msra.mxu0 0.0
    %605 = vmatprep.subr.mxu0 0.0
    %606 = vmatpush2.msra.mxu0 0.0
    %607 = vmatprep.subr.mxu0 0.0
    %608 = vmatpush2.msra.mxu0 0.0
    %609 = vmatprep.subr.mxu0 0.0
    %610 = vmatpush2.msra.mxu0 0.0
    %611 = vmatprep.subr.mxu0 0.0
    %612 = vmatpush2.msra.mxu0 0.0
    %613 = vmatprep.subr.mxu0 0.0
    %614 = vmatpush2.msra.mxu0 0.0
    %615 = vmatprep.subr.mxu0 0.0
    %616 = vmatpush2.msra.mxu0 0.0
    %617 = vmatprep.subr.mxu0 0.0
    %618 = vmatpush2.msra.mxu0 0.0
    %619 = vmatprep.subr.mxu0 0.0
    %620 = vmatpush2.msra.mxu0 0.0
    %621 = vmatprep.subr.mxu0 0.0
    %622 = vmatpush2.msra.mxu0 0.0
    %623 = vmatprep.subr.mxu0 0.0
    %624 = vmatpush2.msra.mxu0 0.0
    %625 = vmatprep.subr.mxu0 0.0
    %626 = vmatpush2.msra.mxu0 0.0
    %627 = vmatprep.subr.mxu0 0.0
    %628 = vmatpush2.msra.mxu0 0.0
    %629 = vmatprep.subr.mxu0 0.0
    %630 = vmatpush2.msra.mxu0 0.0
    %631 = vmatprep.subr.mxu0 0.0
    %632 = vmatpush2.msra.mxu0 0.0
    %633 = vmatprep.subr.mxu0 0.0
    %634 = vmatpush2.msra.mxu0 0.0
    %635 = vmatprep.mubr.f32.mxu0 0.0
    %636 = vmatmul.mubr.f32.gmra.mxu0 %v566
    %v637 = vpop.f32.mrf.mxu0
    %v638 = vadd.f32 %v563, %v637
    %v639 = vpop.f32.mrf.mxu0
    %640 = vmatprep.mubr.f32.mxu0 0.0
    %641 = vmatmul.mubr.f32.gmra.mxu0 %v569
    %v642 = vpop.f32.mrf.mxu0
    %v643 = vadd.f32 %v563, %v642
    %v644 = vpop.f32.mrf.mxu0
    %645 = vdwg.mxu0
    %648 = vrot.lane.b32.xlu0 %v638, 96
    %v649 = vpop.permute.xlu0 %648
    %650 = vrot.lane.b32.xlu0 %v643, 96
    %v651 = vpop.permute.xlu0 %650
    %v654 = vadd.f32 %v638, %v649
    %v655 = vadd.f32 %v643, %v651
    %v656 = vxor.u32 %v654, 2147483648
    %v657 = vxor.u32 %v655, 2147483648
    %v658 = vmul.f32 %v656, 1.442695
    %v659 = vpow.pop %v658
    %v660 = vmul.f32 %v657, 1.442695
    %v661 = vpow.pop %v660
    %v662 = vadd.f32 %v659, 1.0
    %v663 = vadd.f32 %v661, 1.0
    %v664 = vrcp.pop %v662
    %v665 = vmul.f32 1.0, %v664
    %v666 = vrcp.pop %v663
    %v667 = vmul.f32 1.0, %v666
    %v668 = vmul.f32 %v665, %v649
    %v669 = vmul.f32 %v667, %v651
    %v670 = vsub.f32 1.0, %v665
    %v671 = vsub.f32 1.0, %v667
    %v672 = vmul.f32 %v670, %v638
    %v673 = vmul.f32 %v671, %v643
    %v674 = vadd.f32 %v668, %v672
    %v675 = vadd.f32 %v669, %v673
    %v676 = vmax.f32 %v674, 0.0
    %v677 = vmax.f32 %v675, 0.0
    %s678 = scalar_lea.vmem [#allocation2], 64
    %v679 = vld [vmem:[%s678] sm:$0xff]
    %v680 = vld [vmem:[%s678 + $0x8] sm:$0xff]
    %v681 = vld [vmem:[%s678 + $0x10] sm:$0xff]
    %v682 = vld [vmem:[%s678 + $0x18] sm:$0xff]
    %s683 = scalar_lea.vmem %s3, 2
    %v684 = vld [vmem:[%s683] sm:$0x1]
    %v686 = vlaneseq
    %v687 = vshrl.u32 %v686, 7
    %v688 = vsub.s32 0, %v687
    %v689 = vrot.slane %v684, %v688
    %v692 = vsel %vm66, %v676, 0
    %v695 = vsel %vm66, %v677, 0
    %697 = vmatprep.subr.mxu0 0.0
    %698 = vmatpush1.msra.mxu0 0.0
    %699 = vmatprep.subr.mxu0 0.0
    %700 = vmatpush1.msra.mxu0 0.0
    %701 = vmatprep.subr.mxu0 0.0
    %702 = vmatpush1.msra.mxu0 0.0
    %703 = vmatprep.subr.mxu0 0.0
    %704 = vmatpush1.msra.mxu0 0.0
    %705 = vmatprep.subr.mxu0 0.0
    %706 = vmatpush1.msra.mxu0 0.0
    %707 = vmatprep.subr.mxu0 0.0
    %708 = vmatpush1.msra.mxu0 0.0
    %709 = vmatprep.subr.mxu0 0.0
    %710 = vmatpush1.msra.mxu0 0.0
    %711 = vmatprep.subr.mxu0 0.0
    %712 = vmatpush1.msra.mxu0 0.0
    %713 = vmatprep.subr.mxu0 0.0
    %714 = vmatpush1.msra.mxu0 0.0
    %715 = vmatprep.subr.mxu0 0.0
    %716 = vmatpush1.msra.mxu0 0.0
    %717 = vmatprep.subr.mxu0 0.0
    %718 = vmatpush1.msra.mxu0 0.0
    %719 = vmatprep.subr.mxu0 0.0
    %720 = vmatpush1.msra.mxu0 0.0
    %721 = vmatprep.subr.mxu0 0.0
    %722 = vmatpush1.msra.mxu0 %v682
    %723 = vmatprep.subr.mxu0 0.0
    %724 = vmatpush1.msra.mxu0 %v681
    %725 = vmatprep.subr.mxu0 0.0
    %726 = vmatpush1.msra.mxu0 %v680
    %727 = vmatprep.subr.mxu0 0.0
    %728 = vmatpush1.msra.mxu0 %v679
    %729 = vmatprep.subr.mxu0 0.0
    %730 = vmatpush2.msra.mxu0 0.0
    %731 = vmatprep.subr.mxu0 0.0
    %732 = vmatpush2.msra.mxu0 0.0
    %733 = vmatprep.subr.mxu0 0.0
    %734 = vmatpush2.msra.mxu0 0.0
    %735 = vmatprep.subr.mxu0 0.0
    %736 = vmatpush2.msra.mxu0 0.0
    %737 = vmatprep.subr.mxu0 0.0
    %738 = vmatpush2.msra.mxu0 0.0
    %739 = vmatprep.subr.mxu0 0.0
    %740 = vmatpush2.msra.mxu0 0.0
    %741 = vmatprep.subr.mxu0 0.0
    %742 = vmatpush2.msra.mxu0 0.0
    %743 = vmatprep.subr.mxu0 0.0
    %744 = vmatpush2.msra.mxu0 0.0
    %745 = vmatprep.subr.mxu0 0.0
    %746 = vmatpush2.msra.mxu0 0.0
    %747 = vmatprep.subr.mxu0 0.0
    %748 = vmatpush2.msra.mxu0 0.0
    %749 = vmatprep.subr.mxu0 0.0
    %750 = vmatpush2.msra.mxu0 0.0
    %751 = vmatprep.subr.mxu0 0.0
    %752 = vmatpush2.msra.mxu0 0.0
    %753 = vmatprep.subr.mxu0 0.0
    %754 = vmatpush2.msra.mxu0 0.0
    %755 = vmatprep.subr.mxu0 0.0
    %756 = vmatpush2.msra.mxu0 0.0
    %757 = vmatprep.subr.mxu0 0.0
    %758 = vmatpush2.msra.mxu0 0.0
    %759 = vmatprep.subr.mxu0 0.0
    %760 = vmatpush2.msra.mxu0 0.0
    %761 = vmatprep.mubr.f32.mxu0 0.0
    %762 = vmatmul.mubr.f32.gmra.mxu0 %v692
    %v763 = vpop.f32.mrf.mxu0
    %v764 = vadd.f32 %v689, %v763
    %v765 = vpop.f32.mrf.mxu0
    %766 = vmatprep.mubr.f32.mxu0 0.0
    %767 = vmatmul.mubr.f32.gmra.mxu0 %v695
    %v768 = vpop.f32.mrf.mxu0
    %v769 = vadd.f32 %v689, %v768
    %v770 = vpop.f32.mrf.mxu0
    %771 = vdwg.mxu0
    %772 = vmatprep.subr.mxu0 0.0
    %773 = vmatpush1.msra.mxu0 0.0
    %774 = vmatprep.subr.mxu0 0.0
    %775 = vmatpush1.msra.mxu0 0.0
    %776 = vmatprep.subr.mxu0 0.0
    %777 = vmatpush1.msra.mxu0 0.0
    %778 = vmatprep.subr.mxu0 0.0
    %779 = vmatpush1.msra.mxu0 0.0
    %780 = vmatprep.subr.mxu0 0.0
    %781 = vmatpush1.msra.mxu0 0.0
    %782 = vmatprep.subr.mxu0 0.0
    %783 = vmatpush1.msra.mxu0 0.0
    %784 = vmatprep.subr.mxu0 0.0
    %785 = vmatpush1.msra.mxu0 0.0
    %786 = vmatprep.subr.mxu0 0.0
    %787 = vmatpush1.msra.mxu0 0.0
    %788 = vmatprep.subr.mxu0 0.0
    %789 = vmatpush1.msra.mxu0 0.0
    %790 = vmatprep.subr.mxu0 0.0
    %791 = vmatpush1.msra.mxu0 0.0
    %792 = vmatprep.subr.mxu0 0.0
    %793 = vmatpush1.msra.mxu0 0.0
    %794 = vmatprep.subr.mxu0 0.0
    %795 = vmatpush1.msra.mxu0 0.0
    %796 = vmatprep.subr.mxu0 0.0
    %797 = vmatpush1.msra.mxu0 0.0
    %798 = vmatprep.subr.mxu0 0.0
    %799 = vmatpush1.msra.mxu0 0.0
    %800 = vmatprep.subr.mxu0 0.0
    %801 = vmatpush1.msra.mxu0 %v769
    %802 = vmatprep.subr.mxu0 0.0
    %803 = vmatpush1.msra.mxu0 %v764
    %804 = vmatprep.subr.mxu0 0.0
    %805 = vmatpush2.msra.mxu0 0.0
    %806 = vmatprep.subr.mxu0 0.0
    %807 = vmatpush2.msra.mxu0 0.0
    %808 = vmatprep.subr.mxu0 0.0
    %809 = vmatpush2.msra.mxu0 0.0
    %810 = vmatprep.subr.mxu0 0.0
    %811 = vmatpush2.msra.mxu0 0.0
    %812 = vmatprep.subr.mxu0 0.0
    %813 = vmatpush2.msra.mxu0 0.0
    %814 = vmatprep.subr.mxu0 0.0
    %815 = vmatpush2.msra.mxu0 0.0
    %816 = vmatprep.subr.mxu0 0.0
    %817 = vmatpush2.msra.mxu0 0.0
    %818 = vmatprep.subr.mxu0 0.0
    %819 = vmatpush2.msra.mxu0 0.0
    %820 = vmatprep.subr.mxu0 0.0
    %821 = vmatpush2.msra.mxu0 0.0
    %822 = vmatprep.subr.mxu0 0.0
    %823 = vmatpush2.msra.mxu0 0.0
    %824 = vmatprep.subr.mxu0 0.0
    %825 = vmatpush2.msra.mxu0 0.0
    %826 = vmatprep.subr.mxu0 0.0
    %827 = vmatpush2.msra.mxu0 0.0
    %828 = vmatprep.subr.mxu0 0.0
    %829 = vmatpush2.msra.mxu0 0.0
    %830 = vmatprep.subr.mxu0 0.0
    %831 = vmatpush2.msra.mxu0 0.0
    %832 = vmatprep.subr.mxu0 0.0
    %833 = vmatpush2.msra.mxu0 0.0
    %834 = vmatprep.subr.mxu0 0.0
    %835 = vmatpush2.msra.mxu0 0.0
    %836 = vmatprep.mubr.f32.mxu0 0.0
    %837 = vmatmul.mubr.f32.gmra.mxu0 %v150
    %v838 = vpop.f32.mrf.mxu0
    %v839 = vadd.f32 0.0, %v838
    %v840 = vpop.f32.mrf.mxu0
    %841 = vmatprep.mubr.f32.mxu0 0.0
    %842 = vmatmul.mubr.f32.gmra.mxu0 %v153
    %v843 = vpop.f32.mrf.mxu0
    %v844 = vadd.f32 0.0, %v843
    %v845 = vpop.f32.mrf.mxu0
    %846 = vdwg.mxu0
    %849 = vrot.lane.b32.xlu0 %v839, 32
    %v850 = vpop.permute.xlu0 %849
    %851 = vrot.lane.b32.xlu0 %v844, 32
    %v852 = vpop.permute.xlu0 %851
    %v855 = vsel %vm66, %v764, %v850
    %v856 = vsel %vm66, %v769, %v852
    %s857 = scalar_lea.vmem [#allocation4], 128
    %v858 = vld [vmem:[%s857] sm:$0xff]
    %v859 = vld [vmem:[%s857 + $0x8] sm:$0xff]
    %v860 = vld [vmem:[%s857 + $0x10] sm:$0xff]
    %v861 = vld [vmem:[%s857 + $0x18] sm:$0xff]
    %v862 = vld [vmem:[%s857 + $0x20] sm:$0xff]
    %v863 = vld [vmem:[%s857 + $0x28] sm:$0xff]
    %v864 = vld [vmem:[%s857 + $0x30] sm:$0xff]
    %v865 = vld [vmem:[%s857 + $0x38] sm:$0xff]
    %s866 = scalar_lea.vmem %s5, 2
    %v867 = vld [vmem:[%s866] sm:$0x1]
    %v869 = vlaneseq
    %v870 = vshrl.u32 %v869, 7
    %v871 = vsub.s32 0, %v870
    %v872 = vrot.slane %v867, %v871
    %v875 = vsel %vm255, %v855, 0
    %v878 = vsel %vm255, %v856, 0
    %880 = vmatprep.subr.mxu0 0.0
    %881 = vmatpush1.msra.mxu0 0.0
    %882 = vmatprep.subr.mxu0 0.0
    %883 = vmatpush1.msra.mxu0 0.0
    %884 = vmatprep.subr.mxu0 0.0
    %885 = vmatpush1.msra.mxu0 0.0
    %886 = vmatprep.subr.mxu0 0.0
    %887 = vmatpush1.msra.mxu0 0.0
    %888 = vmatprep.subr.mxu0 0.0
    %889 = vmatpush1.msra.mxu0 0.0
    %890 = vmatprep.subr.mxu0 0.0
    %891 = vmatpush1.msra.mxu0 0.0
    %892 = vmatprep.subr.mxu0 0.0
    %893 = vmatpush1.msra.mxu0 0.0
    %894 = vmatprep.subr.mxu0 0.0
    %895 = vmatpush1.msra.mxu0 0.0
    %896 = vmatprep.subr.mxu0 0.0
    %897 = vmatpush1.msra.mxu0 %v865
    %898 = vmatprep.subr.mxu0 0.0
    %899 = vmatpush1.msra.mxu0 %v864
    %900 = vmatprep.subr.mxu0 0.0
    %901 = vmatpush1.msra.mxu0 %v863
    %902 = vmatprep.subr.mxu0 0.0
    %903 = vmatpush1.msra.mxu0 %v862
    %904 = vmatprep.subr.mxu0 0.0
    %905 = vmatpush1.msra.mxu0 %v861
    %906 = vmatprep.subr.mxu0 0.0
    %907 = vmatpush1.msra.mxu0 %v860
    %908 = vmatprep.subr.mxu0 0.0
    %909 = vmatpush1.msra.mxu0 %v859
    %910 = vmatprep.subr.mxu0 0.0
    %911 = vmatpush1.msra.mxu0 %v858
    %912 = vmatprep.subr.mxu0 0.0
    %913 = vmatpush2.msra.mxu0 0.0
    %914 = vmatprep.subr.mxu0 0.0
    %915 = vmatpush2.msra.mxu0 0.0
    %916 = vmatprep.subr.mxu0 0.0
    %917 = vmatpush2.msra.mxu0 0.0
    %918 = vmatprep.subr.mxu0 0.0
    %919 = vmatpush2.msra.mxu0 0.0
    %920 = vmatprep.subr.mxu0 0.0
    %921 = vmatpush2.msra.mxu0 0.0
    %922 = vmatprep.subr.mxu0 0.0
    %923 = vmatpush2.msra.mxu0 0.0
    %924 = vmatprep.subr.mxu0 0.0
    %925 = vmatpush2.msra.mxu0 0.0
    %926 = vmatprep.subr.mxu0 0.0
    %927 = vmatpush2.msra.mxu0 0.0
    %928 = vmatprep.subr.mxu0 0.0
    %929 = vmatpush2.msra.mxu0 0.0
    %930 = vmatprep.subr.mxu0 0.0
    %931 = vmatpush2.msra.mxu0 0.0
    %932 = vmatprep.subr.mxu0 0.0
    %933 = vmatpush2.msra.mxu0 0.0
    %934 = vmatprep.subr.mxu0 0.0
    %935 = vmatpush2.msra.mxu0 0.0
    %936 = vmatprep.subr.mxu0 0.0
    %937 = vmatpush2.msra.mxu0 0.0
    %938 = vmatprep.subr.mxu0 0.0
    %939 = vmatpush2.msra.mxu0 0.0
    %940 = vmatprep.subr.mxu0 0.0
    %941 = vmatpush2.msra.mxu0 0.0
    %942 = vmatprep.subr.mxu0 0.0
    %943 = vmatpush2.msra.mxu0 0.0
    %944 = vmatprep.mubr.f32.mxu0 0.0
    %945 = vmatmul.mubr.f32.gmra.mxu0 %v875
    %v946 = vpop.f32.mrf.mxu0
    %v947 = vadd.f32 %v872, %v946
    %v948 = vpop.f32.mrf.mxu0
    %949 = vmatprep.mubr.f32.mxu0 0.0
    %950 = vmatmul.mubr.f32.gmra.mxu0 %v878
    %v951 = vpop.f32.mrf.mxu0
    %v952 = vadd.f32 %v872, %v951
    %v953 = vpop.f32.mrf.mxu0
    %954 = vdwg.mxu0
    %957 = vrot.lane.b32.xlu0 %v947, 96
    %v958 = vpop.permute.xlu0 %957
    %959 = vrot.lane.b32.xlu0 %v952, 96
    %v960 = vpop.permute.xlu0 %959
    %v963 = vadd.f32 %v947, %v958
    %v964 = vadd.f32 %v952, %v960
    %v965 = vxor.u32 %v963, 2147483648
    %v966 = vxor.u32 %v964, 2147483648
    %v967 = vmul.f32 %v965, 1.442695
    %v968 = vpow.pop %v967
    %v969 = vmul.f32 %v966, 1.442695
    %v970 = vpow.pop %v969
    %v971 = vadd.f32 %v968, 1.0
    %v972 = vadd.f32 %v970, 1.0
    %v973 = vrcp.pop %v971
    %v974 = vmul.f32 1.0, %v973
    %v975 = vrcp.pop %v972
    %v976 = vmul.f32 1.0, %v975
    %v977 = vmul.f32 %v974, %v958
    %v978 = vmul.f32 %v976, %v960
    %v979 = vsub.f32 1.0, %v974
    %v980 = vsub.f32 1.0, %v976
    %v981 = vmul.f32 %v979, %v947
    %v982 = vmul.f32 %v980, %v952
    %v983 = vadd.f32 %v977, %v981
    %v984 = vadd.f32 %v978, %v982
    %v985 = vmax.f32 %v983, 0.0
    %v986 = vmax.f32 %v984, 0.0
    %s987 = scalar_lea.vmem [#allocation2], 96
    %v988 = vld [vmem:[%s987] sm:$0xff]
    %v989 = vld [vmem:[%s987 + $0x8] sm:$0xff]
    %v990 = vld [vmem:[%s987 + $0x10] sm:$0xff]
    %v991 = vld [vmem:[%s987 + $0x18] sm:$0xff]
    %s992 = scalar_lea.vmem %s3, 3
    %v993 = vld [vmem:[%s992] sm:$0x1]
    %v995 = vlaneseq
    %v996 = vshrl.u32 %v995, 7
    %v997 = vsub.s32 0, %v996
    %v998 = vrot.slane %v993, %v997
    %v1001 = vsel %vm66, %v985, 0
    %v1004 = vsel %vm66, %v986, 0
    %1006 = vmatprep.subr.mxu0 0.0
    %1007 = vmatpush1.msra.mxu0 0.0
    %1008 = vmatprep.subr.mxu0 0.0
    %1009 = vmatpush1.msra.mxu0 0.0
    %1010 = vmatprep.subr.mxu0 0.0
    %1011 = vmatpush1.msra.mxu0 0.0
    %1012 = vmatprep.subr.mxu0 0.0
    %1013 = vmatpush1.msra.mxu0 0.0
    %1014 = vmatprep.subr.mxu0 0.0
    %1015 = vmatpush1.msra.mxu0 0.0
    %1016 = vmatprep.subr.mxu0 0.0
    %1017 = vmatpush1.msra.mxu0 0.0
    %1018 = vmatprep.subr.mxu0 0.0
    %1019 = vmatpush1.msra.mxu0 0.0
    %1020 = vmatprep.subr.mxu0 0.0
    %1021 = vmatpush1.msra.mxu0 0.0
    %1022 = vmatprep.subr.mxu0 0.0
    %1023 = vmatpush1.msra.mxu0 0.0
    %1024 = vmatprep.subr.mxu0 0.0
    %1025 = vmatpush1.msra.mxu0 0.0
    %1026 = vmatprep.subr.mxu0 0.0
    %1027 = vmatpush1.msra.mxu0 0.0
    %1028 = vmatprep.subr.mxu0 0.0
    %1029 = vmatpush1.msra.mxu0 0.0
    %1030 = vmatprep.subr.mxu0 0.0
    %1031 = vmatpush1.msra.mxu0 %v991
    %1032 = vmatprep.subr.mxu0 0.0
    %1033 = vmatpush1.msra.mxu0 %v990
    %1034 = vmatprep.subr.mxu0 0.0
    %1035 = vmatpush1.msra.mxu0 %v989
    %1036 = vmatprep.subr.mxu0 0.0
    %1037 = vmatpush1.msra.mxu0 %v988
    %1038 = vmatprep.subr.mxu0 0.0
    %1039 = vmatpush2.msra.mxu0 0.0
    %1040 = vmatprep.subr.mxu0 0.0
    %1041 = vmatpush2.msra.mxu0 0.0
    %1042 = vmatprep.subr.mxu0 0.0
    %1043 = vmatpush2.msra.mxu0 0.0
    %1044 = vmatprep.subr.mxu0 0.0
    %1045 = vmatpush2.msra.mxu0 0.0
    %1046 = vmatprep.subr.mxu0 0.0
    %1047 = vmatpush2.msra.mxu0 0.0
    %1048 = vmatprep.subr.mxu0 0.0
    %1049 = vmatpush2.msra.mxu0 0.0
    %1050 = vmatprep.subr.mxu0 0.0
    %1051 = vmatpush2.msra.mxu0 0.0
    %1052 = vmatprep.subr.mxu0 0.0
    %1053 = vmatpush2.msra.mxu0 0.0
    %1054 = vmatprep.subr.mxu0 0.0
    %1055 = vmatpush2.msra.mxu0 0.0
    %1056 = vmatprep.subr.mxu0 0.0
    %1057 = vmatpush2.msra.mxu0 0.0
    %1058 = vmatprep.subr.mxu0 0.0
    %1059 = vmatpush2.msra.mxu0 0.0
    %1060 = vmatprep.subr.mxu0 0.0
    %1061 = vmatpush2.msra.mxu0 0.0
    %1062 = vmatprep.subr.mxu0 0.0
    %1063 = vmatpush2.msra.mxu0 0.0
    %1064 = vmatprep.subr.mxu0 0.0
    %1065 = vmatpush2.msra.mxu0 0.0
    %1066 = vmatprep.subr.mxu0 0.0
    %1067 = vmatpush2.msra.mxu0 0.0
    %1068 = vmatprep.subr.mxu0 0.0
    %1069 = vmatpush2.msra.mxu0 0.0
    %1070 = vmatprep.mubr.f32.mxu0 0.0
    %1071 = vmatmul.mubr.f32.gmra.mxu0 %v1001
    %v1072 = vpop.f32.mrf.mxu0
    %v1073 = vadd.f32 %v998, %v1072
    %v1074 = vpop.f32.mrf.mxu0
    %1075 = vmatprep.mubr.f32.mxu0 0.0
    %1076 = vmatmul.mubr.f32.gmra.mxu0 %v1004
    %v1077 = vpop.f32.mrf.mxu0
    %v1078 = vadd.f32 %v998, %v1077
    %v1079 = vpop.f32.mrf.mxu0
    %1080 = vdwg.mxu0
    %v1081 = vsel %vm66, %v1073, 0.0
    %v1082 = vrot.slane %v1081, 4
    %v1083 = vadd.f32 %v1081, %v1082
    %v1084 = vrot.slane %v1083, 2
    %v1085 = vadd.f32 %v1083, %v1084
    %v1086 = vrot.slane %v1085, 1
    %v1087 = vadd.f32 %v1085, %v1086
    %v1088 = vsel %vm66, %v1078, 0.0
    %v1089 = vrot.slane %v1088, 4
    %v1090 = vadd.f32 %v1088, %v1089
    %v1091 = vrot.slane %v1090, 2
    %v1092 = vadd.f32 %v1090, %v1091
    %v1093 = vrot.slane %v1092, 1
    %v1094 = vadd.f32 %v1092, %v1093
    %v1095 = vxor.u32 %v1087, 2147483648
    %v1096 = vxor.u32 %v1094, 2147483648
    %v1097 = vmul.f32 %v1095, 1.442695
    %v1098 = vpow.pop %v1097
    %v1099 = vmul.f32 %v1096, 1.442695
    %v1100 = vpow.pop %v1099
    %v1101 = vadd.f32 %v1098, 1.0
    %v1102 = vadd.f32 %v1100, 1.0
    %v1103 = vrcp.pop %v1101
    %v1104 = vmul.f32 1.0, %v1103
    %v1105 = vrcp.pop %v1102
    %v1106 = vmul.f32 1.0, %v1105
    %s1107 = scalar_lea.vmem [#allocation2], 128
    %v1108 = vld [vmem:[%s1107] sm:$0xff]
    %v1109 = vld [vmem:[%s1107 + $0x8] sm:$0xff]
    %v1110 = vld [vmem:[%s1107 + $0x10] sm:$0xff]
    %v1111 = vld [vmem:[%s1107 + $0x18] sm:$0xff]
    %s1112 = scalar_lea.vmem %s3, 4
    %v1113 = vld [vmem:[%s1112] sm:$0x1]
    %v1115 = vlaneseq
    %v1116 = vshrl.u32 %v1115, 7
    %v1117 = vsub.s32 0, %v1116
    %v1118 = vrot.slane %v1113, %v1117
    %vm1122 = vcmask 1041409
    %v1123 = vsel %vm1122, %v1106, %v1104
    %v1124 = vsel %vm66, %v1123, 0
    %1126 = vmatprep.subr.mxu0 0.0
    %1127 = vmatpush1.msra.mxu0 0.0
    %1128 = vmatprep.subr.mxu0 0.0
    %1129 = vmatpush1.msra.mxu0 0.0
    %1130 = vmatprep.subr.mxu0 0.0
    %1131 = vmatpush1.msra.mxu0 0.0
    %1132 = vmatprep.subr.mxu0 0.0
    %1133 = vmatpush1.msra.mxu0 0.0
    %1134 = vmatprep.subr.mxu0 0.0
    %1135 = vmatpush1.msra.mxu0 0.0
    %1136 = vmatprep.subr.mxu0 0.0
    %1137 = vmatpush1.msra.mxu0 0.0
    %1138 = vmatprep.subr.mxu0 0.0
    %1139 = vmatpush1.msra.mxu0 0.0
    %1140 = vmatprep.subr.mxu0 0.0
    %1141 = vmatpush1.msra.mxu0 0.0
    %1142 = vmatprep.subr.mxu0 0.0
    %1143 = vmatpush1.msra.mxu0 0.0
    %1144 = vmatprep.subr.mxu0 0.0
    %1145 = vmatpush1.msra.mxu0 0.0
    %1146 = vmatprep.subr.mxu0 0.0
    %1147 = vmatpush1.msra.mxu0 0.0
    %1148 = vmatprep.subr.mxu0 0.0
    %1149 = vmatpush1.msra.mxu0 0.0
    %1150 = vmatprep.subr.mxu0 0.0
    %1151 = vmatpush1.msra.mxu0 %v1111
    %1152 = vmatprep.subr.mxu0 0.0
    %1153 = vmatpush1.msra.mxu0 %v1110
    %1154 = vmatprep.subr.mxu0 0.0
    %1155 = vmatpush1.msra.mxu0 %v1109
    %1156 = vmatprep.subr.mxu0 0.0
    %1157 = vmatpush1.msra.mxu0 %v1108
    %1158 = vmatprep.subr.mxu0 0.0
    %1159 = vmatpush2.msra.mxu0 0.0
    %1160 = vmatprep.subr.mxu0 0.0
    %1161 = vmatpush2.msra.mxu0 0.0
    %1162 = vmatprep.subr.mxu0 0.0
    %1163 = vmatpush2.msra.mxu0 0.0
    %1164 = vmatprep.subr.mxu0 0.0
    %1165 = vmatpush2.msra.mxu0 0.0
    %1166 = vmatprep.subr.mxu0 0.0
    %1167 = vmatpush2.msra.mxu0 0.0
    %1168 = vmatprep.subr.mxu0 0.0
    %1169 = vmatpush2.msra.mxu0 0.0
    %1170 = vmatprep.subr.mxu0 0.0
    %1171 = vmatpush2.msra.mxu0 0.0
    %1172 = vmatprep.subr.mxu0 0.0
    %1173 = vmatpush2.msra.mxu0 0.0
    %1174 = vmatprep.subr.mxu0 0.0
    %1175 = vmatpush2.msra.mxu0 0.0
    %1176 = vmatprep.subr.mxu0 0.0
    %1177 = vmatpush2.msra.mxu0 0.0
    %1178 = vmatprep.subr.mxu0 0.0
    %1179 = vmatpush2.msra.mxu0 0.0
    %1180 = vmatprep.subr.mxu0 0.0
    %1181 = vmatpush2.msra.mxu0 0.0
    %1182 = vmatprep.subr.mxu0 0.0
    %1183 = vmatpush2.msra.mxu0 0.0
    %1184 = vmatprep.subr.mxu0 0.0
    %1185 = vmatpush2.msra.mxu0 0.0
    %1186 = vmatprep.subr.mxu0 0.0
    %1187 = vmatpush2.msra.mxu0 0.0
    %1188 = vmatprep.subr.mxu0 0.0
    %1189 = vmatpush2.msra.mxu0 0.0
    %1190 = vmatprep.mubr.f32.mxu0 0.0
    %1191 = vmatmul.mubr.f32.gmra.mxu0 %v1124
    %v1192 = vpop.f32.mrf.mxu0
    %v1193 = vadd.f32 %v1118, %v1192
    %v1194 = vpop.f32.mrf.mxu0
    %1195 = vdwg.mxu0
    %v1196 = vmax.f32 %v1193, 0.0
    %s1197 = scalar_lea.vmem [#allocation2], 160
    %v1198 = vld [vmem:[%s1197] sm:$0xff]
    %v1199 = vld [vmem:[%s1197 + $0x8] sm:$0xff]
    %v1200 = vld [vmem:[%s1197 + $0x10] sm:$0xff]
    %v1201 = vld [vmem:[%s1197 + $0x18] sm:$0xff]
    %s1202 = scalar_lea.vmem %s3, 5
    %v1203 = vld [vmem:[%s1202] sm:$0x1]
    %v1205 = vlaneseq
    %v1206 = vshrl.u32 %v1205, 7
    %v1207 = vsub.s32 0, %v1206
    %v1208 = vrot.slane %v1203, %v1207
    %v1211 = vsel %vm66, %v1196, 0
    %1213 = vmatprep.subr.mxu0 0.0
    %1214 = vmatpush1.msra.mxu0 0.0
    %1215 = vmatprep.subr.mxu0 0.0
    %1216 = vmatpush1.msra.mxu0 0.0
    %1217 = vmatprep.subr.mxu0 0.0
    %1218 = vmatpush1.msra.mxu0 0.0
    %1219 = vmatprep.subr.mxu0 0.0
    %1220 = vmatpush1.msra.mxu0 0.0
    %1221 = vmatprep.subr.mxu0 0.0
    %1222 = vmatpush1.msra.mxu0 0.0
    %1223 = vmatprep.subr.mxu0 0.0
    %1224 = vmatpush1.msra.mxu0 0.0
    %1225 = vmatprep.subr.mxu0 0.0
    %1226 = vmatpush1.msra.mxu0 0.0
    %1227 = vmatprep.subr.mxu0 0.0
    %1228 = vmatpush1.msra.mxu0 0.0
    %1229 = vmatprep.subr.mxu0 0.0
    %1230 = vmatpush1.msra.mxu0 0.0
    %1231 = vmatprep.subr.mxu0 0.0
    %1232 = vmatpush1.msra.mxu0 0.0
    %1233 = vmatprep.subr.mxu0 0.0
    %1234 = vmatpush1.msra.mxu0 0.0
    %1235 = vmatprep.subr.mxu0 0.0
    %1236 = vmatpush1.msra.mxu0 0.0
    %1237 = vmatprep.subr.mxu0 0.0
    %1238 = vmatpush1.msra.mxu0 %v1201
    %1239 = vmatprep.subr.mxu0 0.0
    %1240 = vmatpush1.msra.mxu0 %v1200
    %1241 = vmatprep.subr.mxu0 0.0
    %1242 = vmatpush1.msra.mxu0 %v1199
    %1243 = vmatprep.subr.mxu0 0.0
    %1244 = vmatpush1.msra.mxu0 %v1198
    %1245 = vmatprep.subr.mxu0 0.0
    %1246 = vmatpush2.msra.mxu0 0.0
    %1247 = vmatprep.subr.mxu0 0.0
    %1248 = vmatpush2.msra.mxu0 0.0
    %1249 = vmatprep.subr.mxu0 0.0
    %1250 = vmatpush2.msra.mxu0 0.0
    %1251 = vmatprep.subr.mxu0 0.0
    %1252 = vmatpush2.msra.mxu0 0.0
    %1253 = vmatprep.subr.mxu0 0.0
    %1254 = vmatpush2.msra.mxu0 0.0
    %1255 = vmatprep.subr.mxu0 0.0
    %1256 = vmatpush2.msra.mxu0 0.0
    %1257 = vmatprep.subr.mxu0 0.0
    %1258 = vmatpush2.msra.mxu0 0.0
    %1259 = vmatprep.subr.mxu0 0.0
    %1260 = vmatpush2.msra.mxu0 0.0
    %1261 = vmatprep.subr.mxu0 0.0
    %1262 = vmatpush2.msra.mxu0 0.0
    %1263 = vmatprep.subr.mxu0 0.0
    %1264 = vmatpush2.msra.mxu0 0.0
    %1265 = vmatprep.subr.mxu0 0.0
    %1266 = vmatpush2.msra.mxu0 0.0
    %1267 = vmatprep.subr.mxu0 0.0
    %1268 = vmatpush2.msra.mxu0 0.0
    %1269 = vmatprep.subr.mxu0 0.0
    %1270 = vmatpush2.msra.mxu0 0.0
    %1271 = vmatprep.subr.mxu0 0.0
    %1272 = vmatpush2.msra.mxu0 0.0
    %1273 = vmatprep.subr.mxu0 0.0
    %1274 = vmatpush2.msra.mxu0 0.0
    %1275 = vmatprep.subr.mxu0 0.0
    %1276 = vmatpush2.msra.mxu0 0.0
    %1277 = vmatprep.mubr.f32.mxu0 0.0
    %1278 = vmatmul.mubr.f32.gmra.mxu0 %v1211
    %v1279 = vpop.f32.mrf.mxu0
    %v1280 = vadd.f32 %v1208, %v1279
    %v1281 = vpop.f32.mrf.mxu0
    %1282 = vdwg.mxu0
    %v1283 = vtanh.pop %v1280
    %s1284 = scalar_lea.vmem [#allocation2], 192
    %v1285 = vld [vmem:[%s1284] sm:$0xff]
    %v1286 = vld [vmem:[%s1284 + $0x8] sm:$0xff]
    %v1287 = vld [vmem:[%s1284 + $0x10] sm:$0xff]
    %v1288 = vld [vmem:[%s1284 + $0x18] sm:$0xff]
    %s1289 = scalar_lea.vmem %s3, 6
    %v1290 = vld [vmem:[%s1289] sm:$0x1]
    %v1292 = vlaneseq
    %v1293 = vshrl.u32 %v1292, 7
    %v1294 = vsub.s32 0, %v1293
    %v1295 = vrot.slane %v1290, %v1294
    %v1298 = vsel %vm66, %v1283, 0
    %1300 = vmatprep.subr.mxu0 0.0
    %1301 = vmatpush1.msra.mxu0 0.0
    %1302 = vmatprep.subr.mxu0 0.0
    %1303 = vmatpush1.msra.mxu0 0.0
    %1304 = vmatprep.subr.mxu0 0.0
    %1305 = vmatpush1.msra.mxu0 0.0
    %1306 = vmatprep.subr.mxu0 0.0
    %1307 = vmatpush1.msra.mxu0 0.0
    %1308 = vmatprep.subr.mxu0 0.0
    %1309 = vmatpush1.msra.mxu0 0.0
    %1310 = vmatprep.subr.mxu0 0.0
    %1311 = vmatpush1.msra.mxu0 0.0
    %1312 = vmatprep.subr.mxu0 0.0
    %1313 = vmatpush1.msra.mxu0 0.0
    %1314 = vmatprep.subr.mxu0 0.0
    %1315 = vmatpush1.msra.mxu0 0.0
    %1316 = vmatprep.subr.mxu0 0.0
    %1317 = vmatpush1.msra.mxu0 0.0
    %1318 = vmatprep.subr.mxu0 0.0
    %1319 = vmatpush1.msra.mxu0 0.0
    %1320 = vmatprep.subr.mxu0 0.0
    %1321 = vmatpush1.msra.mxu0 0.0
    %1322 = vmatprep.subr.mxu0 0.0
    %1323 = vmatpush1.msra.mxu0 0.0
    %1324 = vmatprep.subr.mxu0 0.0
    %1325 = vmatpush1.msra.mxu0 %v1288
    %1326 = vmatprep.subr.mxu0 0.0
    %1327 = vmatpush1.msra.mxu0 %v1287
    %1328 = vmatprep.subr.mxu0 0.0
    %1329 = vmatpush1.msra.mxu0 %v1286
    %1330 = vmatprep.subr.mxu0 0.0
    %1331 = vmatpush1.msra.mxu0 %v1285
    %1332 = vmatprep.subr.mxu0 0.0
    %1333 = vmatpush2.msra.mxu0 0.0
    %1334 = vmatprep.subr.mxu0 0.0
    %1335 = vmatpush2.msra.mxu0 0.0
    %1336 = vmatprep.subr.mxu0 0.0
    %1337 = vmatpush2.msra.mxu0 0.0
    %1338 = vmatprep.subr.mxu0 0.0
    %1339 = vmatpush2.msra.mxu0 0.0
    %1340 = vmatprep.subr.mxu0 0.0
    %1341 = vmatpush2.msra.mxu0 0.0
    %1342 = vmatprep.subr.mxu0 0.0
    %1343 = vmatpush2.msra.mxu0 0.0
    %1344 = vmatprep.subr.mxu0 0.0
    %1345 = vmatpush2.msra.mxu0 0.0
    %1346 = vmatprep.subr.mxu0 0.0
    %1347 = vmatpush2.msra.mxu0 0.0
    %1348 = vmatprep.subr.mxu0 0.0
    %1349 = vmatpush2.msra.mxu0 0.0
    %1350 = vmatprep.subr.mxu0 0.0
    %1351 = vmatpush2.msra.mxu0 0.0
    %1352 = vmatprep.subr.mxu0 0.0
    %1353 = vmatpush2.msra.mxu0 0.0
    %1354 = vmatprep.subr.mxu0 0.0
    %1355 = vmatpush2.msra.mxu0 0.0
    %1356 = vmatprep.subr.mxu0 0.0
    %1357 = vmatpush2.msra.mxu0 0.0
    %1358 = vmatprep.subr.mxu0 0.0
    %1359 = vmatpush2.msra.mxu0 0.0
    %1360 = vmatprep.subr.mxu0 0.0
    %1361 = vmatpush2.msra.mxu0 0.0
    %1362 = vmatprep.subr.mxu0 0.0
    %1363 = vmatpush2.msra.mxu0 0.0
    %1364 = vmatprep.mubr.f32.mxu0 0.0
    %1365 = vmatmul.mubr.f32.gmra.mxu0 %v1298
    %v1366 = vpop.f32.mrf.mxu0
    %v1367 = vadd.f32 %v1295, %v1366
    %v1368 = vpop.f32.mrf.mxu0
    %1369 = vdwg.mxu0
    %v1370 = vsel %vm66, %v1367, 0.0
    %1371 = vst [vmem:[%s6] sm:$0x3] %v1370
    // Predicated region
    $region34: #{gcn_forward.1} parent=1 // pred_check
      _
    $region35: #{gcn_forward.1} parent=1 // pred_check_branch
      %1373 = sbr.rel (0) target = $region37
    $region36: #{gcn_forward.1} parent=1 // pred_region
      _
    $region37: #{gcn_forward.1} parent=1 // pred_fallthru
      _
    // Predicated region
    $region38: #{gcn_forward.1} parent=1 // pred_check
      _
    $region39: #{gcn_forward.1} parent=1 // pred_check_branch
      %1375 = sbr.rel (0) target = $region41
    $region40: #{gcn_forward.1} parent=1 // pred_region
      _
    $region41: #{gcn_forward.1} parent=1 // pred_fallthru
      _
    %1376 = vsyncpa [#allocation3], 1
    %1377 = vsyncpa [#allocation5], 1

</llo_original>
